<compile_context>
chip_gen: v7x
topology: tpu7x:2x2x1
jax: 0.10.0
libtpu: 0.0.40
codegen_flags: <defaults>
</compile_context>

<pallas_src>
import functools

import jax
import jax.numpy as jnp
import numpy as np
from jax import lax
from jax.experimental import pallas as pl
from jax.experimental.pallas import tpu as pltpu

_OUT_LANES = 128
_BISECT_ITERS = 31   # lc >= 0 -> int32 bit patterns in [0, 2^31); 31 halvings resolve exactly


def _refinedet_loss_kernel(gt_ref, priors_ref, loc_ref, conf_ref, out_ref,
                           *, threshold, negpos_ratio, var0, var1):
    gt = gt_ref[...].astype(jnp.float32)      # (Bt, 5, T): x1,y1,x2,y2,label
    pr = priors_ref[...]                      # (4, P)  center form cx,cy,w,h  (f32)
    loc3 = loc_ref[...].astype(jnp.float32)   # (Bt, 4, P)
    conf3 = conf_ref[...]                     # (Bt, C, P)  input dtype, cast per class
    # TODO(synk): for large C, stream per-class rows straight from conf_ref instead of
    # holding the whole (Bt,C,P) value live.

    Bt, _, T = gt.shape
    C = conf3.shape[1]
    P = pr.shape[1]

    # ---- per-component gt rows as lane-dense 2D (Bt, T) ---------------------------
    gx1 = gt[:, 0, :]
    gy1 = gt[:, 1, :]
    gx2 = gt[:, 2, :]
    gy2 = gt[:, 3, :]
    glab = gt[:, 4, :]

    # ---- prior constants: hoisted + pre-broadcast once (JAX does not CSE broadcasts)
    pcx = pr[0:1, :]
    pcy = pr[1:2, :]
    pw = pr[2:3, :]
    ph = pr[3:4, :]
    px1 = jnp.broadcast_to(pcx - 0.5 * pw, (Bt, P))
    py1 = jnp.broadcast_to(pcy - 0.5 * ph, (Bt, P))
    px2 = jnp.broadcast_to(pcx + 0.5 * pw, (Bt, P))
    py2 = jnp.broadcast_to(pcy + 0.5 * ph, (Bt, P))
    area_p = jnp.broadcast_to(pw * ph, (Bt, P))
    p_lane = lax.broadcasted_iota(jnp.int32, (Bt, P), 1)
    t_lane = lax.broadcasted_iota(jnp.int32, (Bt, T), 1)

    # ---- matching: loop over gt boxes, only (Bt,P) carries live ---------------------
    # Carries the running best overlap and the matched box/label directly, so no
    # (Bt,T,P) temporaries and no separate matched-gather are ever materialized.
    # Force-matching is done inline: each gt overwrites its best prior with overlap
    # 2.0 (IoU <= 1 can never undo it; a later gt's force wins, matching the torch
    # `for j: best_truth_idx[best_prior_idx[j]] = j` last-write-wins loop).
    def match_body(t, carry):
        bto, mx1, my1, mx2, my2, mlab = carry
        sel_t = t_lane == t                                          # (Bt, T)

        def pick(v):                                                 # (Bt,T) -> (Bt,1)
            return jnp.sum(jnp.where(sel_t, v, 0.0), axis=1, keepdims=True)

        tx1, ty1, tx2, ty2, tl = pick(gx1), pick(gy1), pick(gx2), pick(gy2), pick(glab)

        iw = jnp.maximum(jnp.minimum(tx2, px2) - jnp.maximum(tx1, px1), 0.0)
        ih = jnp.maximum(jnp.minimum(ty2, py2) - jnp.maximum(ty1, py1), 0.0)
        inter = iw * ih                                              # (Bt, P)
        area_t = (tx2 - tx1) * (ty2 - ty1)                           # (Bt, 1)
        # NOTE: exact divide on purpose -- the IoU feeds a hard >=0.5 threshold and
        # argmax matching decisions; pl.reciprocal(approx=True) could flip matches.
        ov = inter / (area_t + area_p - inter)                       # (Bt, P)

        bpo = jnp.max(ov, axis=1, keepdims=True)                     # best prior for this gt
        bpi = jnp.min(jnp.where(ov == bpo, p_lane, P), axis=1, keepdims=True)
        forced = p_lane == bpi                                       # (Bt, P)
        take = ov > bto                                              # strict: first gt wins ties
        sel = jnp.logical_or(take, forced)

        bto = jnp.where(forced, 2.0, jnp.where(take, ov, bto))
        mx1 = jnp.where(sel, tx1, mx1)
        my1 = jnp.where(sel, ty1, my1)
        mx2 = jnp.where(sel, tx2, mx2)
        my2 = jnp.where(sel, ty2, my2)
        mlab = jnp.where(sel, tl, mlab)
        return bto, mx1, my1, mx2, my2, mlab

    init = (jnp.full((Bt, P), -1.0, jnp.float32),) + tuple(
        jnp.zeros((Bt, P), jnp.float32) for _ in range(5))
    bto, mx1, my1, mx2, my2, mlab = lax.fori_loop(0, T, match_body, init)

    conf_t = jnp.where(bto < threshold, 0.0, mlab + 1.0)             # (Bt, P)
    pos = conf_t > 0.0

    # ---- encode(matched, priors, variances), all (Bt,P) -----------------------------
    g_cx = ((mx1 + mx2) * 0.5 - pcx) / (var0 * pw)
    g_cy = ((my1 + my2) * 0.5 - pcy) / (var0 * ph)
    # clamp so degenerate / padded gt boxes stay finite (masked out by `pos` below)
    g_w = jnp.log(jnp.maximum(mx2 - mx1, 1e-12) / pw) / var1
    g_h = jnp.log(jnp.maximum(my2 - my1, 1e-12) / ph) / var1

    # ---- localization loss: smooth-L1 over positive priors --------------------------
    def smooth_l1(pred, tgt):
        d = pred - tgt
        ad = jnp.abs(d)
        return jnp.where(ad < 1.0, 0.5 * d * d, ad - 0.5)

    sl1 = (smooth_l1(loc3[:, 0, :], g_cx) + smooth_l1(loc3[:, 1, :], g_cy)
           + smooth_l1(loc3[:, 2, :], g_w) + smooth_l1(loc3[:, 3, :], g_h))
    # jnp.where (not multiply) so garbage at non-positive priors cannot NaN the sum
    loss_l_b = jnp.sum(jnp.where(pos, sl1, 0.0), axis=1, keepdims=True)      # (Bt,1)

    # ---- per-prior softmax CE: online logsumexp over classes (fused target gather) --
    tgt = conf_t.astype(jnp.int32)
    x0 = conf3[:, 0, :].astype(jnp.float32)
    m = x0
    s = jnp.ones_like(x0)
    g = jnp.where(tgt == 0, x0, 0.0)
    for c in range(1, C):
        xc = conf3[:, c, :].astype(jnp.float32)
        m_new = jnp.maximum(m, xc)
        s = s * jnp.exp(m - m_new) + jnp.exp(xc - m_new)
        g = jnp.where(tgt == c, xc, g)
        m = m_new
    ce = m + jnp.log(s) - g                                          # (Bt, P), >= 0

    # ---- hard negative mining: exact top-k sum via bit-pattern bisection ------------
    # loss_c over (pos | neg) == sum_{pos} ce + (sum of the top-k values of lc),
    # lc = ce zeroed at positives, k = min(3*num_pos, P-1).  The k-th largest value
    # is found EXACTLY by bisecting the int32 bit pattern (monotone for non-negative,
    # NaN-free f32), keeping only (Bt,P)/(Bt,1) temporaries live.
    lc = jnp.where(pos, 0.0, ce)
    num_pos_b = jnp.sum(jnp.where(pos, 1.0, 0.0), axis=1, keepdims=True)     # (Bt,1)
    k = jnp.minimum(negpos_ratio * num_pos_b, float(P - 1))
    lc_bits = pltpu.bitcast(lc, jnp.int32)
    lo = jnp.zeros((Bt, 1), jnp.int32)
    hi = jnp.max(lc_bits, axis=1, keepdims=True)

    def bisect(_, carry):
        lo, hi = carry
        mid = lo + ((hi - lo + 1) >> 1)
        cnt = jnp.sum(jnp.where(lc_bits >= mid, 1.0, 0.0), axis=1, keepdims=True)
        go_up = cnt >= k
        return jnp.where(go_up, mid, lo), jnp.where(go_up, hi, mid - 1)

    lo, _ = lax.fori_loop(0, _BISECT_ITERS, bisect, (lo, hi), unroll=True)
    kth = pltpu.bitcast(lo, jnp.float32)                             # (Bt,1) k-th largest

    gt_mask = lc > kth
    c_gt = jnp.sum(jnp.where(gt_mask, 1.0, 0.0), axis=1, keepdims=True)
    sum_gt = jnp.sum(jnp.where(gt_mask, lc, 0.0), axis=1, keepdims=True)
    hard_neg_sum = sum_gt + kth * (k - c_gt)                         # ties at the k-th value
    pos_ce_sum = jnp.sum(jnp.where(pos, ce, 0.0), axis=1, keepdims=True)
    loss_c_b = pos_ce_sum + hard_neg_sum                             # (Bt,1)

    # ---- single lane-dense output tile per grid step (one unmasked full-tile store) --
    packed = jnp.concatenate(
        [loss_l_b, loss_c_b, num_pos_b, jnp.zeros((Bt, 5), jnp.float32)], axis=1)  # (Bt,8)
    out_ref[...] = jnp.broadcast_to(packed[:, :, None], (Bt, 8, _OUT_LANES))


def _vmem_budget_bytes():
    # Generation-aware budget: ~3/4 of physical VMEM (v7x: 48 MiB, v5e/v6e: 96 MiB).
    try:
        cap = int(pltpu.get_tpu_info().vmem_capacity_bytes)
    except Exception:
        cap = 64 * 1024 * 1024
    return max(32 * 1024 * 1024, (cap // 4) * 3)


def _pick_batch_tile(B):
    # Largest Bt <= 8 that divides B (Bt images fill the 8 vreg sublanes).
    Bt = 1
    for cand in (8, 4, 2, 1):
        if B % cand == 0:
            Bt = cand
            break
    # Prefer >= 2 grid blocks so the "parallel" grid axis can shard across v7x's two
    # TensorCores; on 1-TC chips this costs only one extra ~0.35us grid step.
    if B // Bt < 2 and Bt > 1:
        Bt //= 2
    return Bt


def refinedet_multibox_loss(predictions, targets, num_classes, use_ARM=False,
                            threshold=0.5, negpos_ratio=3, variance=(0.1, 0.2)):
    arm_loc, arm_conf, odm_loc, odm_conf, priors = predictions
    if use_ARM:
        # TODO(synk): use_ARM=True branch (matching against ARM-decoded anchors and
        # zeroing positives whose ARM objectness softmax <= theta) not implemented.
        raise NotImplementedError("use_ARM=True path not implemented")
    loc_data, conf_data = arm_loc, arm_conf

    B, P, _ = loc_data.shape
    C = num_classes
    priors = priors[:P, :]

    # TODO(synk): variable-length per-image target lists are not supported;
    # targets must be a fixed-T [B, T, 5] tensor of valid (non-degenerate) boxes.
    targets = jnp.asarray(targets, dtype=jnp.float32)            # [B, T, 5]
    labels = targets[:, :, 0]
    truths = targets[:, :, 1:]
    if num_classes == 2:
        labels = (labels >= 0).astype(jnp.float32)
    T = truths.shape[1]

    # stacked gt matrix: (B, 5, T) = x1,y1,x2,y2,label
    gt_cat = jnp.concatenate([truths, labels[:, :, None]], axis=2)       # (B,T,5)
    gt_cat = jnp.transpose(gt_cat, (0, 2, 1)).astype(jnp.float32)        # (B,5,T)

    # Channel-major loc/conf; incoming dtype is kept (bf16 stays bf16 across HBM->VMEM,
    # cast to f32 inside the kernel).
    # TODO(synk): at production sizes the detection head should emit channel-major
    # [B,4,P]/[B,C,P] directly -- these transposes are an extra HBM pass over conf.
    loc_k = jnp.transpose(loc_data, (0, 2, 1))                           # [B,4,P]
    conf_k = jnp.transpose(conf_data, (0, 2, 1))                         # [B,C,P]
    priors_k = jnp.transpose(priors.astype(jnp.float32), (1, 0))         # [4,P]

    Bt = _pick_batch_tile(B)
    grid = (B // Bt,)

    kernel = functools.partial(
        _refinedet_loss_kernel, threshold=float(threshold),
        negpos_ratio=float(negpos_ratio),
        var0=float(variance[0]), var1=float(variance[1]))

    out = pl.pallas_call(
        kernel,
        out_shape=jax.ShapeDtypeStruct((B, 8, _OUT_LANES), jnp.float32),
        grid_spec=pltpu.PrefetchScalarGridSpec(
            num_scalar_prefetch=0,
            grid=grid,
            in_specs=[
                pl.BlockSpec((Bt, 5, T), lambda g: (g, 0, 0)),   # stacked gt + label
                pl.BlockSpec((4, P), lambda g: (0, 0)),          # priors
                pl.BlockSpec((Bt, 4, P), lambda g: (g, 0, 0)),   # loc preds
                pl.BlockSpec((Bt, C, P), lambda g: (g, 0, 0)),   # conf preds
            ],
            out_specs=pl.BlockSpec((Bt, 8, _OUT_LANES), lambda g: (g, 0, 0)),
        ),
        compiler_params=pltpu.CompilerParams(
            dimension_semantics=("parallel",),        # per-image partials, no carry
            vmem_limit_bytes=_vmem_budget_bytes()),
    )(gt_cat, priors_k, loc_k, conf_k)

    # final reduction over B scalars + normalization (negligible wrapper work).
    n = jnp.sum(out[:, 2, 0])
    # NOTE: no divide-by-zero guard -- matches the PyTorch module's semantics.
    loss_l = 5.0 * jnp.sum(out[:, 0, 0]) / n
    loss_c = jnp.sum(out[:, 1, 0]) / n
    return loss_l, loss_c


# ---------------- pure-JAX reference (mirrors the PyTorch forward) -----------
def _reference_loss(loc_data, conf_data, priors, targets, num_classes,
                    threshold=0.5, negpos_ratio=3, variance=(0.1, 0.2)):
    B, P, _ = loc_data.shape
    pf = jnp.concatenate([priors[:, :2] - priors[:, 2:] / 2,
                          priors[:, :2] + priors[:, 2:] / 2], axis=1)
    loc_t_l, conf_t_l = [], []
    for b in range(B):
        truths = targets[b, :, 1:]
        labels = targets[b, :, 0]
        if num_classes == 2:
            labels = (labels >= 0).astype(jnp.float32)
        tl = jnp.maximum(truths[:, None, :2], pf[None, :, :2])
        br = jnp.minimum(truths[:, None, 2:], pf[None, :, 2:])
        wh = jnp.maximum(br - tl, 0.0)
        inter = wh[..., 0] * wh[..., 1]
        at = (truths[:, 2] - truths[:, 0]) * (truths[:, 3] - truths[:, 1])
        ap = (pf[:, 2] - pf[:, 0]) * (pf[:, 3] - pf[:, 1])
        ov = inter / (at[:, None] + ap[None, :] - inter)
        bto = ov.max(axis=0)
        bti = ov.argmax(axis=0)
        bpi = ov.argmax(axis=1)
        bto = bto.at[bpi].set(2.0)
        bti = bti.at[bpi].set(jnp.arange(truths.shape[0]))
        matches = truths[bti]
        conf = labels[bti] + 1.0
        conf = jnp.where(bto < threshold, 0.0, conf)
        g_cxcy = ((matches[:, :2] + matches[:, 2:]) / 2 - priors[:, :2]) / (variance[0] * priors[:, 2:])
        g_wh = jnp.log((matches[:, 2:] - matches[:, :2]) / priors[:, 2:]) / variance[1]
        loc_t_l.append(jnp.concatenate([g_cxcy, g_wh], axis=1))
        conf_t_l.append(conf)
    loc_t = jnp.stack(loc_t_l)
    conf_t = jnp.stack(conf_t_l).astype(jnp.int32)

    pos = conf_t > 0
    d = loc_data - loc_t
    ad = jnp.abs(d)
    sl1 = jnp.where(ad < 1.0, 0.5 * d * d, ad - 0.5)
    loss_l = jnp.sum(sl1 * pos[..., None])

    m = jnp.max(conf_data, axis=-1, keepdims=True)
    lse = jnp.log(jnp.sum(jnp.exp(conf_data - m), axis=-1)) + m[..., 0]
    gathered = jnp.take_along_axis(conf_data, conf_t[..., None], axis=-1)[..., 0]
    lc = jnp.where(pos, 0.0, lse - gathered)
    loss_idx = jnp.argsort(-lc, axis=1)
    idx_rank = jnp.argsort(loss_idx, axis=1)
    num_pos = jnp.sum(pos, axis=1)
    num_neg = jnp.minimum(negpos_ratio * num_pos, P - 1)
    neg = idx_rank < num_neg[:, None]
    union = pos | neg
    loss_c = jnp.sum(jnp.where(union, lse - gathered, 0.0))
    N = jnp.sum(num_pos).astype(jnp.float32)
    return 5.0 * loss_l / N, loss_c / N


if __name__ == "__main__":
    key = jax.random.PRNGKey(0)
    B, P, C, T = 2, 128, 4, 3     # batch, priors, classes, objects per image
    k1, k2, k3, k4, k5, k6, k7 = jax.random.split(key, 7)

    # deterministic prior grid (center form cx, cy, w, h)
    gx = (jnp.arange(16, dtype=jnp.float32) + 0.5) / 16.0
    gy = (jnp.arange(8, dtype=jnp.float32) + 0.5) / 8.0
    cx, cy = jnp.meshgrid(gx, gy)
    priors = jnp.stack([cx.reshape(-1), cy.reshape(-1),
                        jnp.full((P,), 0.15, jnp.float32),
                        jnp.full((P,), 0.20, jnp.float32)], axis=1)      # [P,4]

    # ground truth: [B, T, 5] = (label, x1, y1, x2, y2)
    centers = jax.random.uniform(k1, (B, T, 2), minval=0.25, maxval=0.75)
    sizes = jax.random.uniform(k2, (B, T, 2), minval=0.12, maxval=0.30)
    boxes = jnp.concatenate([centers - sizes / 2, centers + sizes / 2], axis=-1)
    labels = jax.random.randint(k3, (B, T), 0, C - 1).astype(jnp.float32)
    targets = jnp.concatenate([labels[..., None], boxes], axis=-1)

    arm_loc = 0.1 * jax.random.normal(k4, (B, P, 4), dtype=jnp.float32)
    arm_conf = jax.random.normal(k5, (B, P, C), dtype=jnp.float32)
    odm_loc = 0.1 * jax.random.normal(k6, (B, P, 4), dtype=jnp.float32)
    odm_conf = jax.random.normal(k7, (B, P, C), dtype=jnp.float32)
    predictions = (arm_loc, arm_conf, odm_loc, odm_conf, priors)

    loss_l, loss_c = refinedet_multibox_loss(predictions, targets,
                                             num_classes=C, use_ARM=False)
    jax.block_until_ready((loss_l, loss_c))

    ref_l, ref_c = _reference_loss(arm_loc, arm_conf, priors, targets, C)
    assert np.allclose(np.array(loss_l), np.array(ref_l), rtol=1e-3, atol=1e-3), (loss_l, ref_l)
    assert np.allclose(np.array(loss_c), np.array(ref_c), rtol=1e-3, atol=1e-3), (loss_c, ref_c)

    print("KERNEL_OK")
</pallas_src>

<mosaic_0001>
module attributes {stable_mosaic.version = 11 : i64} {
  func.func @_refinedet_loss_kernel(%arg0: i32, %arg1: memref<1x5x3xf32, #tpu.memory_space<vmem>>, %arg2: memref<4x128xf32, #tpu.memory_space<vmem>>, %arg3: memref<1x4x128xf32, #tpu.memory_space<vmem>>, %arg4: memref<1x4x128xf32, #tpu.memory_space<vmem>>, %arg5: memref<1x8x128xf32, #tpu.memory_space<vmem>>) attributes {dimension_semantics = [#tpu.dimension_semantics<parallel>], iteration_bounds = array<i64: 2>, scalar_prefetch = 0 : i64, scratch_operands = 0 : i64, tpu.core_type = #tpu.core_type<tc>, window_params = [{transform_indices = @transform_0, window_bounds = array<i64: 1, 5, 3>}, {pipeline_mode = #tpu.pipeline_mode<synchronous>, transform_indices = @transform_1, window_bounds = array<i64: 4, 128>}, {transform_indices = @transform_2, window_bounds = array<i64: 1, 4, 128>}, {transform_indices = @transform_3, window_bounds = array<i64: 1, 4, 128>}, {transform_indices = @transform_4, window_bounds = array<i64: 1, 8, 128>}]} {
    %c0 = arith.constant 0 : index
    %c0_0 = arith.constant 0 : index
    %c0_1 = arith.constant 0 : index
    %0 = vector.load %arg1[%c0, %c0_0, %c0_1] : memref<1x5x3xf32, #tpu.memory_space<vmem>>, vector<1x5x3xf32>
    %c0_2 = arith.constant 0 : index
    %c0_3 = arith.constant 0 : index
    %1 = vector.load %arg2[%c0_2, %c0_3] : memref<4x128xf32, #tpu.memory_space<vmem>>, vector<4x128xf32>
    %c0_4 = arith.constant 0 : index
    %c0_5 = arith.constant 0 : index
    %c0_6 = arith.constant 0 : index
    %2 = vector.load %arg3[%c0_4, %c0_5, %c0_6] : memref<1x4x128xf32, #tpu.memory_space<vmem>>, vector<1x4x128xf32>
    %c0_7 = arith.constant 0 : index
    %c0_8 = arith.constant 0 : index
    %c0_9 = arith.constant 0 : index
    %3 = vector.load %arg4[%c0_7, %c0_8, %c0_9] : memref<1x4x128xf32, #tpu.memory_space<vmem>>, vector<1x4x128xf32>
    %4 = vector.extract_strided_slice %0 {offsets = [0, 0, 0], sizes = [1, 1, 3], strides = [1, 1, 1]} : vector<1x5x3xf32> to vector<1x1x3xf32>
    %5 = vector.shape_cast %4 : vector<1x1x3xf32> to vector<1x3xf32>
    %6 = vector.extract_strided_slice %0 {offsets = [0, 1, 0], sizes = [1, 1, 3], strides = [1, 1, 1]} : vector<1x5x3xf32> to vector<1x1x3xf32>
    %7 = vector.shape_cast %6 : vector<1x1x3xf32> to vector<1x3xf32>
    %8 = vector.extract_strided_slice %0 {offsets = [0, 2, 0], sizes = [1, 1, 3], strides = [1, 1, 1]} : vector<1x5x3xf32> to vector<1x1x3xf32>
    %9 = vector.shape_cast %8 : vector<1x1x3xf32> to vector<1x3xf32>
    %10 = vector.extract_strided_slice %0 {offsets = [0, 3, 0], sizes = [1, 1, 3], strides = [1, 1, 1]} : vector<1x5x3xf32> to vector<1x1x3xf32>
    %11 = vector.shape_cast %10 : vector<1x1x3xf32> to vector<1x3xf32>
    %12 = vector.extract_strided_slice %0 {offsets = [0, 4, 0], sizes = [1, 1, 3], strides = [1, 1, 1]} : vector<1x5x3xf32> to vector<1x1x3xf32>
    %13 = vector.shape_cast %12 : vector<1x1x3xf32> to vector<1x3xf32>
    %14 = vector.extract_strided_slice %1 {offsets = [0, 0], sizes = [1, 128], strides = [1, 1]} : vector<4x128xf32> to vector<1x128xf32>
    %15 = vector.extract_strided_slice %1 {offsets = [1, 0], sizes = [1, 128], strides = [1, 1]} : vector<4x128xf32> to vector<1x128xf32>
    %16 = vector.extract_strided_slice %1 {offsets = [2, 0], sizes = [1, 128], strides = [1, 1]} : vector<4x128xf32> to vector<1x128xf32>
    %17 = vector.extract_strided_slice %1 {offsets = [3, 0], sizes = [1, 128], strides = [1, 1]} : vector<4x128xf32> to vector<1x128xf32>
    %cst = arith.constant 5.000000e-01 : f32
    %18 = vector.broadcast %cst : f32 to vector<1x128xf32>
    %19 = arith.mulf %18, %16 : vector<1x128xf32>
    %20 = arith.subf %14, %19 : vector<1x128xf32>
    %cst_10 = arith.constant 5.000000e-01 : f32
    %21 = vector.broadcast %cst_10 : f32 to vector<1x128xf32>
    %22 = arith.mulf %21, %17 : vector<1x128xf32>
    %23 = arith.subf %15, %22 : vector<1x128xf32>
    %cst_11 = arith.constant 5.000000e-01 : f32
    %24 = vector.broadcast %cst_11 : f32 to vector<1x128xf32>
    %25 = arith.mulf %24, %16 : vector<1x128xf32>
    %26 = arith.addf %14, %25 : vector<1x128xf32>
    %cst_12 = arith.constant 5.000000e-01 : f32
    %27 = vector.broadcast %cst_12 : f32 to vector<1x128xf32>
    %28 = arith.mulf %27, %17 : vector<1x128xf32>
    %29 = arith.addf %15, %28 : vector<1x128xf32>
    %30 = arith.mulf %16, %17 : vector<1x128xf32>
    %31 = tpu.iota {dimensions = array<i32: 1>} : vector<1x128xi32>
    %32 = tpu.iota {dimensions = array<i32: 1>} : vector<1x3xi32>
    %cst_13 = arith.constant -1.000000e+00 : f32
    %33 = vector.broadcast %cst_13 : f32 to vector<1x128xf32>
    %cst_14 = arith.constant 0.000000e+00 : f32
    %34 = vector.broadcast %cst_14 : f32 to vector<1x128xf32>
    %cst_15 = arith.constant 0.000000e+00 : f32
    %35 = vector.broadcast %cst_15 : f32 to vector<1x128xf32>
    %cst_16 = arith.constant 0.000000e+00 : f32
    %36 = vector.broadcast %cst_16 : f32 to vector<1x128xf32>
    %cst_17 = arith.constant 0.000000e+00 : f32
    %37 = vector.broadcast %cst_17 : f32 to vector<1x128xf32>
    %cst_18 = arith.constant 0.000000e+00 : f32
    %38 = vector.broadcast %cst_18 : f32 to vector<1x128xf32>
    %c0_i32 = arith.constant 0 : i32
    %c3_i32 = arith.constant 3 : i32
    %39 = arith.addi %c0_i32, %c3_i32 : i32
    %c1_i32 = arith.constant 1 : i32
    %40:6 = scf.for %arg6 = %c0_i32 to %39 step %c1_i32 iter_args(%arg7 = %33, %arg8 = %34, %arg9 = %35, %arg10 = %36, %arg11 = %37, %arg12 = %38) -> (vector<1x128xf32>, vector<1x128xf32>, vector<1x128xf32>, vector<1x128xf32>, vector<1x128xf32>, vector<1x128xf32>)  : i32 {
      %778 = vector.broadcast %arg6 : i32 to vector<1x3xi32>
      %779 = arith.cmpi eq, %32, %778 : vector<1x3xi32>
      %cst_260 = arith.constant 0.000000e+00 : f32
      %780 = vector.broadcast %cst_260 : f32 to vector<1x3xf32>
      %781 = arith.select %779, %5, %780 : vector<1x3xi1>, vector<1x3xf32>
      %cst_261 = arith.constant dense<0.000000e+00> : vector<1xf32>
      %782 = vector.multi_reduction <add>, %781, %cst_261 [1] : vector<1x3xf32> to vector<1xf32>
      %783 = vector.shape_cast %782 : vector<1xf32> to vector<1x1xf32>
      %cst_262 = arith.constant 0.000000e+00 : f32
      %784 = vector.broadcast %cst_262 : f32 to vector<1x3xf32>
      %785 = arith.select %779, %7, %784 : vector<1x3xi1>, vector<1x3xf32>
      %cst_263 = arith.constant dense<0.000000e+00> : vector<1xf32>
      %786 = vector.multi_reduction <add>, %785, %cst_263 [1] : vector<1x3xf32> to vector<1xf32>
      %787 = vector.shape_cast %786 : vector<1xf32> to vector<1x1xf32>
      %cst_264 = arith.constant 0.000000e+00 : f32
      %788 = vector.broadcast %cst_264 : f32 to vector<1x3xf32>
      %789 = arith.select %779, %9, %788 : vector<1x3xi1>, vector<1x3xf32>
      %cst_265 = arith.constant dense<0.000000e+00> : vector<1xf32>
      %790 = vector.multi_reduction <add>, %789, %cst_265 [1] : vector<1x3xf32> to vector<1xf32>
      %791 = vector.shape_cast %790 : vector<1xf32> to vector<1x1xf32>
      %cst_266 = arith.constant 0.000000e+00 : f32
      %792 = vector.broadcast %cst_266 : f32 to vector<1x3xf32>
      %793 = arith.select %779, %11, %792 : vector<1x3xi1>, vector<1x3xf32>
      %cst_267 = arith.constant dense<0.000000e+00> : vector<1xf32>
      %794 = vector.multi_reduction <add>, %793, %cst_267 [1] : vector<1x3xf32> to vector<1xf32>
      %795 = vector.shape_cast %794 : vector<1xf32> to vector<1x1xf32>
      %cst_268 = arith.constant 0.000000e+00 : f32
      %796 = vector.broadcast %cst_268 : f32 to vector<1x3xf32>
      %797 = arith.select %779, %13, %796 : vector<1x3xi1>, vector<1x3xf32>
      %cst_269 = arith.constant dense<0.000000e+00> : vector<1xf32>
      %798 = vector.multi_reduction <add>, %797, %cst_269 [1] : vector<1x3xf32> to vector<1xf32>
      %799 = vector.shape_cast %798 : vector<1xf32> to vector<1x1xf32>
      %800 = vector.broadcast %791 : vector<1x1xf32> to vector<1x128xf32>
      %801 = arith.minimumf %800, %26 : vector<1x128xf32>
      %802 = vector.broadcast %783 : vector<1x1xf32> to vector<1x128xf32>
      %803 = arith.maximumf %802, %20 : vector<1x128xf32>
      %804 = arith.subf %801, %803 : vector<1x128xf32>
      %cst_270 = arith.constant 0.000000e+00 : f32
      %805 = vector.broadcast %cst_270 : f32 to vector<1x128xf32>
      %806 = arith.maximumf %804, %805 : vector<1x128xf32>
      %807 = vector.broadcast %795 : vector<1x1xf32> to vector<1x128xf32>
      %808 = arith.minimumf %807, %29 : vector<1x128xf32>
      %809 = vector.broadcast %787 : vector<1x1xf32> to vector<1x128xf32>
      %810 = arith.maximumf %809, %23 : vector<1x128xf32>
      %811 = arith.subf %808, %810 : vector<1x128xf32>
      %cst_271 = arith.constant 0.000000e+00 : f32
      %812 = vector.broadcast %cst_271 : f32 to vector<1x128xf32>
      %813 = arith.maximumf %811, %812 : vector<1x128xf32>
      %814 = arith.mulf %806, %813 : vector<1x128xf32>
      %815 = arith.subf %791, %783 : vector<1x1xf32>
      %816 = arith.subf %795, %787 : vector<1x1xf32>
      %817 = arith.mulf %815, %816 : vector<1x1xf32>
      %818 = vector.broadcast %817 : vector<1x1xf32> to vector<1x128xf32>
      %819 = arith.addf %818, %30 : vector<1x128xf32>
      %820 = arith.subf %819, %814 : vector<1x128xf32>
      %821 = arith.divf %814, %820 : vector<1x128xf32>
      %cst_272 = arith.constant dense<0xFF800000> : vector<1xf32>
      %822 = vector.multi_reduction <maximumf>, %821, %cst_272 [1] : vector<1x128xf32> to vector<1xf32>
      %823 = vector.shape_cast %822 : vector<1xf32> to vector<1x1xf32>
      %824 = vector.broadcast %823 : vector<1x1xf32> to vector<1x128xf32>
      %825 = arith.cmpf oeq, %821, %824 : vector<1x128xf32>
      %c128_i32 = arith.constant 128 : i32
      %826 = vector.broadcast %c128_i32 : i32 to vector<1x128xi32>
      %827 = arith.select %825, %31, %826 : vector<1x128xi1>, vector<1x128xi32>
      %cst_273 = arith.constant dense<2147483647> : vector<1xi32>
      %828 = vector.multi_reduction <minsi>, %827, %cst_273 [1] : vector<1x128xi32> to vector<1xi32>
      %829 = vector.shape_cast %828 : vector<1xi32> to vector<1x1xi32>
      %830 = vector.broadcast %829 : vector<1x1xi32> to vector<1x128xi32>
      %831 = arith.cmpi eq, %31, %830 : vector<1x128xi32>
      %832 = arith.cmpf ogt, %821, %arg7 : vector<1x128xf32>
      %833 = arith.ori %832, %831 : vector<1x128xi1>
      %834 = arith.select %832, %821, %arg7 : vector<1x128xi1>, vector<1x128xf32>
      %cst_274 = arith.constant 2.000000e+00 : f32
      %835 = vector.broadcast %cst_274 : f32 to vector<1x128xf32>
      %836 = arith.select %831, %835, %834 : vector<1x128xi1>, vector<1x128xf32>
      %837 = vector.shape_cast %783 : vector<1x1xf32> to vector<1x1xf32>
      %838 = vector.broadcast %837 : vector<1x1xf32> to vector<1x128xf32>
      %839 = arith.select %833, %838, %arg8 : vector<1x128xi1>, vector<1x128xf32>
      %840 = vector.shape_cast %787 : vector<1x1xf32> to vector<1x1xf32>
      %841 = vector.broadcast %840 : vector<1x1xf32> to vector<1x128xf32>
      %842 = arith.select %833, %841, %arg9 : vector<1x128xi1>, vector<1x128xf32>
      %843 = vector.shape_cast %791 : vector<1x1xf32> to vector<1x1xf32>
      %844 = vector.broadcast %843 : vector<1x1xf32> to vector<1x128xf32>
      %845 = arith.select %833, %844, %arg10 : vector<1x128xi1>, vector<1x128xf32>
      %846 = vector.shape_cast %795 : vector<1x1xf32> to vector<1x1xf32>
      %847 = vector.broadcast %846 : vector<1x1xf32> to vector<1x128xf32>
      %848 = arith.select %833, %847, %arg11 : vector<1x128xi1>, vector<1x128xf32>
      %849 = vector.shape_cast %799 : vector<1x1xf32> to vector<1x1xf32>
      %850 = vector.broadcast %849 : vector<1x1xf32> to vector<1x128xf32>
      %851 = arith.select %833, %850, %arg12 : vector<1x128xi1>, vector<1x128xf32>
      scf.yield %836, %839, %842, %845, %848, %851 : vector<1x128xf32>, vector<1x128xf32>, vector<1x128xf32>, vector<1x128xf32>, vector<1x128xf32>, vector<1x128xf32>
    }
    %c3_i32_19 = arith.constant 3 : i32
    %cst_20 = arith.constant 5.000000e-01 : f32
    %41 = vector.broadcast %cst_20 : f32 to vector<1x128xf32>
    %42 = arith.cmpf olt, %40#0, %41 : vector<1x128xf32>
    %cst_21 = arith.constant 1.000000e+00 : f32
    %43 = vector.broadcast %cst_21 : f32 to vector<1x128xf32>
    %44 = arith.addf %40#5, %43 : vector<1x128xf32>
    %cst_22 = arith.constant 0.000000e+00 : f32
    %45 = vector.broadcast %cst_22 : f32 to vector<1x128xf32>
    %46 = arith.select %42, %45, %44 : vector<1x128xi1>, vector<1x128xf32>
    %cst_23 = arith.constant 0.000000e+00 : f32
    %47 = vector.broadcast %cst_23 : f32 to vector<1x128xf32>
    %48 = arith.cmpf ogt, %46, %47 : vector<1x128xf32>
    %49 = arith.addf %40#1, %40#3 : vector<1x128xf32>
    %cst_24 = arith.constant 5.000000e-01 : f32
    %50 = vector.broadcast %cst_24 : f32 to vector<1x128xf32>
    %51 = arith.mulf %49, %50 : vector<1x128xf32>
    %52 = arith.subf %51, %14 : vector<1x128xf32>
    %cst_25 = arith.constant 1.000000e-01 : f32
    %53 = vector.broadcast %cst_25 : f32 to vector<1x128xf32>
    %54 = arith.mulf %53, %16 : vector<1x128xf32>
    %55 = arith.divf %52, %54 : vector<1x128xf32>
    %56 = arith.addf %40#2, %40#4 : vector<1x128xf32>
    %cst_26 = arith.constant 5.000000e-01 : f32
    %57 = vector.broadcast %cst_26 : f32 to vector<1x128xf32>
    %58 = arith.mulf %56, %57 : vector<1x128xf32>
    %59 = arith.subf %58, %15 : vector<1x128xf32>
    %cst_27 = arith.constant 1.000000e-01 : f32
    %60 = vector.broadcast %cst_27 : f32 to vector<1x128xf32>
    %61 = arith.mulf %60, %17 : vector<1x128xf32>
    %62 = arith.divf %59, %61 : vector<1x128xf32>
    %63 = arith.subf %40#3, %40#1 : vector<1x128xf32>
    %cst_28 = arith.constant 9.99999996E-13 : f32
    %64 = vector.broadcast %cst_28 : f32 to vector<1x128xf32>
    %65 = arith.maximumf %63, %64 : vector<1x128xf32>
    %66 = arith.divf %65, %16 : vector<1x128xf32>
    %67 = math.log %66 : vector<1x128xf32>
    %cst_29 = arith.constant 2.000000e-01 : f32
    %68 = vector.broadcast %cst_29 : f32 to vector<1x128xf32>
    %69 = arith.divf %67, %68 : vector<1x128xf32>
    %70 = arith.subf %40#4, %40#2 : vector<1x128xf32>
    %cst_30 = arith.constant 9.99999996E-13 : f32
    %71 = vector.broadcast %cst_30 : f32 to vector<1x128xf32>
    %72 = arith.maximumf %70, %71 : vector<1x128xf32>
    %73 = arith.divf %72, %17 : vector<1x128xf32>
    %74 = math.log %73 : vector<1x128xf32>
    %cst_31 = arith.constant 2.000000e-01 : f32
    %75 = vector.broadcast %cst_31 : f32 to vector<1x128xf32>
    %76 = arith.divf %74, %75 : vector<1x128xf32>
    %77 = vector.extract_strided_slice %2 {offsets = [0, 0, 0], sizes = [1, 1, 128], strides = [1, 1, 1]} : vector<1x4x128xf32> to vector<1x1x128xf32>
    %78 = vector.shape_cast %77 : vector<1x1x128xf32> to vector<1x128xf32>
    %79 = arith.subf %78, %55 : vector<1x128xf32>
    %80 = math.absf %79 : vector<1x128xf32>
    %cst_32 = arith.constant 1.000000e+00 : f32
    %81 = vector.broadcast %cst_32 : f32 to vector<1x128xf32>
    %82 = arith.cmpf olt, %80, %81 : vector<1x128xf32>
    %cst_33 = arith.constant 5.000000e-01 : f32
    %83 = vector.broadcast %cst_33 : f32 to vector<1x128xf32>
    %84 = arith.mulf %83, %79 : vector<1x128xf32>
    %85 = arith.mulf %84, %79 : vector<1x128xf32>
    %cst_34 = arith.constant 5.000000e-01 : f32
    %86 = vector.broadcast %cst_34 : f32 to vector<1x128xf32>
    %87 = arith.subf %80, %86 : vector<1x128xf32>
    %88 = arith.select %82, %85, %87 : vector<1x128xi1>, vector<1x128xf32>
    %89 = vector.extract_strided_slice %2 {offsets = [0, 1, 0], sizes = [1, 1, 128], strides = [1, 1, 1]} : vector<1x4x128xf32> to vector<1x1x128xf32>
    %90 = vector.shape_cast %89 : vector<1x1x128xf32> to vector<1x128xf32>
    %91 = arith.subf %90, %62 : vector<1x128xf32>
    %92 = math.absf %91 : vector<1x128xf32>
    %cst_35 = arith.constant 1.000000e+00 : f32
    %93 = vector.broadcast %cst_35 : f32 to vector<1x128xf32>
    %94 = arith.cmpf olt, %92, %93 : vector<1x128xf32>
    %cst_36 = arith.constant 5.000000e-01 : f32
    %95 = vector.broadcast %cst_36 : f32 to vector<1x128xf32>
    %96 = arith.mulf %95, %91 : vector<1x128xf32>
    %97 = arith.mulf %96, %91 : vector<1x128xf32>
    %cst_37 = arith.constant 5.000000e-01 : f32
    %98 = vector.broadcast %cst_37 : f32 to vector<1x128xf32>
    %99 = arith.subf %92, %98 : vector<1x128xf32>
    %100 = arith.select %94, %97, %99 : vector<1x128xi1>, vector<1x128xf32>
    %101 = arith.addf %88, %100 : vector<1x128xf32>
    %102 = vector.extract_strided_slice %2 {offsets = [0, 2, 0], sizes = [1, 1, 128], strides = [1, 1, 1]} : vector<1x4x128xf32> to vector<1x1x128xf32>
    %103 = vector.shape_cast %102 : vector<1x1x128xf32> to vector<1x128xf32>
    %104 = arith.subf %103, %69 : vector<1x128xf32>
    %105 = math.absf %104 : vector<1x128xf32>
    %cst_38 = arith.constant 1.000000e+00 : f32
    %106 = vector.broadcast %cst_38 : f32 to vector<1x128xf32>
    %107 = arith.cmpf olt, %105, %106 : vector<1x128xf32>
    %cst_39 = arith.constant 5.000000e-01 : f32
    %108 = vector.broadcast %cst_39 : f32 to vector<1x128xf32>
    %109 = arith.mulf %108, %104 : vector<1x128xf32>
    %110 = arith.mulf %109, %104 : vector<1x128xf32>
    %cst_40 = arith.constant 5.000000e-01 : f32
    %111 = vector.broadcast %cst_40 : f32 to vector<1x128xf32>
    %112 = arith.subf %105, %111 : vector<1x128xf32>
    %113 = arith.select %107, %110, %112 : vector<1x128xi1>, vector<1x128xf32>
    %114 = arith.addf %101, %113 : vector<1x128xf32>
    %115 = vector.extract_strided_slice %2 {offsets = [0, 3, 0], sizes = [1, 1, 128], strides = [1, 1, 1]} : vector<1x4x128xf32> to vector<1x1x128xf32>
    %116 = vector.shape_cast %115 : vector<1x1x128xf32> to vector<1x128xf32>
    %117 = arith.subf %116, %76 : vector<1x128xf32>
    %118 = math.absf %117 : vector<1x128xf32>
    %cst_41 = arith.constant 1.000000e+00 : f32
    %119 = vector.broadcast %cst_41 : f32 to vector<1x128xf32>
    %120 = arith.cmpf olt, %118, %119 : vector<1x128xf32>
    %cst_42 = arith.constant 5.000000e-01 : f32
    %121 = vector.broadcast %cst_42 : f32 to vector<1x128xf32>
    %122 = arith.mulf %121, %117 : vector<1x128xf32>
    %123 = arith.mulf %122, %117 : vector<1x128xf32>
    %cst_43 = arith.constant 5.000000e-01 : f32
    %124 = vector.broadcast %cst_43 : f32 to vector<1x128xf32>
    %125 = arith.subf %118, %124 : vector<1x128xf32>
    %126 = arith.select %120, %123, %125 : vector<1x128xi1>, vector<1x128xf32>
    %127 = arith.addf %114, %126 : vector<1x128xf32>
    %cst_44 = arith.constant 0.000000e+00 : f32
    %128 = vector.broadcast %cst_44 : f32 to vector<1x128xf32>
    %129 = arith.select %48, %127, %128 : vector<1x128xi1>, vector<1x128xf32>
    %cst_45 = arith.constant dense<0.000000e+00> : vector<1xf32>
    %130 = vector.multi_reduction <add>, %129, %cst_45 [1] : vector<1x128xf32> to vector<1xf32>
    %131 = vector.shape_cast %130 : vector<1xf32> to vector<1x1xf32>
    %132 = arith.fptosi %46 : vector<1x128xf32> to vector<1x128xi32>
    %133 = vector.extract_strided_slice %3 {offsets = [0, 0, 0], sizes = [1, 1, 128], strides = [1, 1, 1]} : vector<1x4x128xf32> to vector<1x1x128xf32>
    %134 = vector.shape_cast %133 : vector<1x1x128xf32> to vector<1x128xf32>
    %cst_46 = arith.constant 1.000000e+00 : f32
    %135 = vector.broadcast %cst_46 : f32 to vector<1x128xf32>
    %c0_i32_47 = arith.constant 0 : i32
    %136 = vector.broadcast %c0_i32_47 : i32 to vector<1x128xi32>
    %137 = arith.cmpi eq, %132, %136 : vector<1x128xi32>
    %cst_48 = arith.constant 0.000000e+00 : f32
    %138 = vector.broadcast %cst_48 : f32 to vector<1x128xf32>
    %139 = arith.select %137, %134, %138 : vector<1x128xi1>, vector<1x128xf32>
    %140 = vector.extract_strided_slice %3 {offsets = [0, 1, 0], sizes = [1, 1, 128], strides = [1, 1, 1]} : vector<1x4x128xf32> to vector<1x1x128xf32>
    %141 = vector.shape_cast %140 : vector<1x1x128xf32> to vector<1x128xf32>
    %142 = arith.maximumf %134, %141 : vector<1x128xf32>
    %143 = arith.subf %134, %142 : vector<1x128xf32>
    %144 = math.exp %143 : vector<1x128xf32>
    %145 = arith.mulf %135, %144 : vector<1x128xf32>
    %146 = arith.subf %141, %142 : vector<1x128xf32>
    %147 = math.exp %146 : vector<1x128xf32>
    %148 = arith.addf %145, %147 : vector<1x128xf32>
    %c1_i32_49 = arith.constant 1 : i32
    %149 = vector.broadcast %c1_i32_49 : i32 to vector<1x128xi32>
    %150 = arith.cmpi eq, %132, %149 : vector<1x128xi32>
    %151 = arith.select %150, %141, %139 : vector<1x128xi1>, vector<1x128xf32>
    %152 = vector.extract_strided_slice %3 {offsets = [0, 2, 0], sizes = [1, 1, 128], strides = [1, 1, 1]} : vector<1x4x128xf32> to vector<1x1x128xf32>
    %153 = vector.shape_cast %152 : vector<1x1x128xf32> to vector<1x128xf32>
    %154 = arith.maximumf %142, %153 : vector<1x128xf32>
    %155 = arith.subf %142, %154 : vector<1x128xf32>
    %156 = math.exp %155 : vector<1x128xf32>
    %157 = arith.mulf %148, %156 : vector<1x128xf32>
    %158 = arith.subf %153, %154 : vector<1x128xf32>
    %159 = math.exp %158 : vector<1x128xf32>
    %160 = arith.addf %157, %159 : vector<1x128xf32>
    %c2_i32 = arith.constant 2 : i32
    %161 = vector.broadcast %c2_i32 : i32 to vector<1x128xi32>
    %162 = arith.cmpi eq, %132, %161 : vector<1x128xi32>
    %163 = arith.select %162, %153, %151 : vector<1x128xi1>, vector<1x128xf32>
    %164 = vector.extract_strided_slice %3 {offsets = [0, 3, 0], sizes = [1, 1, 128], strides = [1, 1, 1]} : vector<1x4x128xf32> to vector<1x1x128xf32>
    %165 = vector.shape_cast %164 : vector<1x1x128xf32> to vector<1x128xf32>
    %166 = arith.maximumf %154, %165 : vector<1x128xf32>
    %167 = arith.subf %154, %166 : vector<1x128xf32>
    %168 = math.exp %167 : vector<1x128xf32>
    %169 = arith.mulf %160, %168 : vector<1x128xf32>
    %170 = arith.subf %165, %166 : vector<1x128xf32>
    %171 = math.exp %170 : vector<1x128xf32>
    %172 = arith.addf %169, %171 : vector<1x128xf32>
    %c3_i32_50 = arith.constant 3 : i32
    %173 = vector.broadcast %c3_i32_50 : i32 to vector<1x128xi32>
    %174 = arith.cmpi eq, %132, %173 : vector<1x128xi32>
    %175 = arith.select %174, %165, %163 : vector<1x128xi1>, vector<1x128xf32>
    %176 = math.log %172 : vector<1x128xf32>
    %177 = arith.addf %166, %176 : vector<1x128xf32>
    %178 = arith.subf %177, %175 : vector<1x128xf32>
    %cst_51 = arith.constant 0.000000e+00 : f32
    %179 = vector.broadcast %cst_51 : f32 to vector<1x128xf32>
    %180 = arith.select %48, %179, %178 : vector<1x128xi1>, vector<1x128xf32>
    %cst_52 = arith.constant 1.000000e+00 : f32
    %cst_53 = arith.constant 0.000000e+00 : f32
    %181 = vector.broadcast %cst_52 : f32 to vector<1x128xf32>
    %182 = vector.broadcast %cst_53 : f32 to vector<1x128xf32>
    %183 = arith.select %48, %181, %182 : vector<1x128xi1>, vector<1x128xf32>
    %cst_54 = arith.constant dense<0.000000e+00> : vector<1xf32>
    %184 = vector.multi_reduction <add>, %183, %cst_54 [1] : vector<1x128xf32> to vector<1xf32>
    %185 = vector.shape_cast %184 : vector<1xf32> to vector<1x1xf32>
    %cst_55 = arith.constant 3.000000e+00 : f32
    %186 = vector.broadcast %cst_55 : f32 to vector<1x1xf32>
    %187 = arith.mulf %186, %185 : vector<1x1xf32>
    %cst_56 = arith.constant 1.270000e+02 : f32
    %188 = vector.broadcast %cst_56 : f32 to vector<1x1xf32>
    %189 = arith.minimumf %187, %188 : vector<1x1xf32>
    %190 = tpu.bitcast %180 : vector<1x128xf32> -> vector<1x128xi32>
    %c0_i32_57 = arith.constant 0 : i32
    %191 = vector.broadcast %c0_i32_57 : i32 to vector<1x1xi32>
    %cst_58 = arith.constant dense<-2147483648> : vector<1xi32>
    %192 = vector.multi_reduction <maxsi>, %190, %cst_58 [1] : vector<1x128xi32> to vector<1xi32>
    %193 = vector.shape_cast %192 : vector<1xi32> to vector<1x1xi32>
    %c0_i32_59 = arith.constant 0 : i32
    %194 = arith.subi %193, %191 : vector<1x1xi32>
    %c1_i32_60 = arith.constant 1 : i32
    %195 = vector.broadcast %c1_i32_60 : i32 to vector<1x1xi32>
    %196 = arith.addi %194, %195 : vector<1x1xi32>
    %c1_i32_61 = arith.constant 1 : i32
    %197 = vector.broadcast %c1_i32_61 : i32 to vector<1x1xi32>
    %198 = arith.shrsi %196, %197 : vector<1x1xi32>
    %199 = arith.addi %191, %198 : vector<1x1xi32>
    %200 = vector.broadcast %199 : vector<1x1xi32> to vector<1x128xi32>
    %201 = arith.cmpi sge, %190, %200 : vector<1x128xi32>
    %cst_62 = arith.constant 1.000000e+00 : f32
    %cst_63 = arith.constant 0.000000e+00 : f32
    %202 = vector.broadcast %cst_62 : f32 to vector<1x128xf32>
    %203 = vector.broadcast %cst_63 : f32 to vector<1x128xf32>
    %204 = arith.select %201, %202, %203 : vector<1x128xi1>, vector<1x128xf32>
    %cst_64 = arith.constant dense<0.000000e+00> : vector<1xf32>
    %205 = vector.multi_reduction <add>, %204, %cst_64 [1] : vector<1x128xf32> to vector<1xf32>
    %206 = vector.shape_cast %205 : vector<1xf32> to vector<1x1xf32>
    %207 = arith.cmpf oge, %206, %189 : vector<1x1xf32>
    %208 = arith.select %207, %199, %191 : vector<1x1xi1>, vector<1x1xi32>
    %c1_i32_65 = arith.constant 1 : i32
    %209 = vector.broadcast %c1_i32_65 : i32 to vector<1x1xi32>
    %210 = arith.subi %199, %209 : vector<1x1xi32>
    %211 = arith.select %207, %193, %210 : vector<1x1xi1>, vector<1x1xi32>
    %c1_i32_66 = arith.constant 1 : i32
    %212 = arith.subi %211, %208 : vector<1x1xi32>
    %c1_i32_67 = arith.constant 1 : i32
    %213 = vector.broadcast %c1_i32_67 : i32 to vector<1x1xi32>
    %214 = arith.addi %212, %213 : vector<1x1xi32>
    %c1_i32_68 = arith.constant 1 : i32
    %215 = vector.broadcast %c1_i32_68 : i32 to vector<1x1xi32>
    %216 = arith.shrsi %214, %215 : vector<1x1xi32>
    %217 = arith.addi %208, %216 : vector<1x1xi32>
    %218 = vector.broadcast %217 : vector<1x1xi32> to vector<1x128xi32>
    %219 = arith.cmpi sge, %190, %218 : vector<1x128xi32>
    %cst_69 = arith.constant 1.000000e+00 : f32
    %cst_70 = arith.constant 0.000000e+00 : f32
    %220 = vector.broadcast %cst_69 : f32 to vector<1x128xf32>
    %221 = vector.broadcast %cst_70 : f32 to vector<1x128xf32>
    %222 = arith.select %219, %220, %221 : vector<1x128xi1>, vector<1x128xf32>
    %cst_71 = arith.constant dense<0.000000e+00> : vector<1xf32>
    %223 = vector.multi_reduction <add>, %222, %cst_71 [1] : vector<1x128xf32> to vector<1xf32>
    %224 = vector.shape_cast %223 : vector<1xf32> to vector<1x1xf32>
    %225 = arith.cmpf oge, %224, %189 : vector<1x1xf32>
    %226 = arith.select %225, %217, %208 : vector<1x1xi1>, vector<1x1xi32>
    %c1_i32_72 = arith.constant 1 : i32
    %227 = vector.broadcast %c1_i32_72 : i32 to vector<1x1xi32>
    %228 = arith.subi %217, %227 : vector<1x1xi32>
    %229 = arith.select %225, %211, %228 : vector<1x1xi1>, vector<1x1xi32>
    %c2_i32_73 = arith.constant 2 : i32
    %230 = arith.subi %229, %226 : vector<1x1xi32>
    %c1_i32_74 = arith.constant 1 : i32
    %231 = vector.broadcast %c1_i32_74 : i32 to vector<1x1xi32>
    %232 = arith.addi %230, %231 : vector<1x1xi32>
    %c1_i32_75 = arith.constant 1 : i32
    %233 = vector.broadcast %c1_i32_75 : i32 to vector<1x1xi32>
    %234 = arith.shrsi %232, %233 : vector<1x1xi32>
    %235 = arith.addi %226, %234 : vector<1x1xi32>
    %236 = vector.broadcast %235 : vector<1x1xi32> to vector<1x128xi32>
    %237 = arith.cmpi sge, %190, %236 : vector<1x128xi32>
    %cst_76 = arith.constant 1.000000e+00 : f32
    %cst_77 = arith.constant 0.000000e+00 : f32
    %238 = vector.broadcast %cst_76 : f32 to vector<1x128xf32>
    %239 = vector.broadcast %cst_77 : f32 to vector<1x128xf32>
    %240 = arith.select %237, %238, %239 : vector<1x128xi1>, vector<1x128xf32>
    %cst_78 = arith.constant dense<0.000000e+00> : vector<1xf32>
    %241 = vector.multi_reduction <add>, %240, %cst_78 [1] : vector<1x128xf32> to vector<1xf32>
    %242 = vector.shape_cast %241 : vector<1xf32> to vector<1x1xf32>
    %243 = arith.cmpf oge, %242, %189 : vector<1x1xf32>
    %244 = arith.select %243, %235, %226 : vector<1x1xi1>, vector<1x1xi32>
    %c1_i32_79 = arith.constant 1 : i32
    %245 = vector.broadcast %c1_i32_79 : i32 to vector<1x1xi32>
    %246 = arith.subi %235, %245 : vector<1x1xi32>
    %247 = arith.select %243, %229, %246 : vector<1x1xi1>, vector<1x1xi32>
    %c3_i32_80 = arith.constant 3 : i32
    %248 = arith.subi %247, %244 : vector<1x1xi32>
    %c1_i32_81 = arith.constant 1 : i32
    %249 = vector.broadcast %c1_i32_81 : i32 to vector<1x1xi32>
    %250 = arith.addi %248, %249 : vector<1x1xi32>
    %c1_i32_82 = arith.constant 1 : i32
    %251 = vector.broadcast %c1_i32_82 : i32 to vector<1x1xi32>
    %252 = arith.shrsi %250, %251 : vector<1x1xi32>
    %253 = arith.addi %244, %252 : vector<1x1xi32>
    %254 = vector.broadcast %253 : vector<1x1xi32> to vector<1x128xi32>
    %255 = arith.cmpi sge, %190, %254 : vector<1x128xi32>
    %cst_83 = arith.constant 1.000000e+00 : f32
    %cst_84 = arith.constant 0.000000e+00 : f32
    %256 = vector.broadcast %cst_83 : f32 to vector<1x128xf32>
    %257 = vector.broadcast %cst_84 : f32 to vector<1x128xf32>
    %258 = arith.select %255, %256, %257 : vector<1x128xi1>, vector<1x128xf32>
    %cst_85 = arith.constant dense<0.000000e+00> : vector<1xf32>
    %259 = vector.multi_reduction <add>, %258, %cst_85 [1] : vector<1x128xf32> to vector<1xf32>
    %260 = vector.shape_cast %259 : vector<1xf32> to vector<1x1xf32>
    %261 = arith.cmpf oge, %260, %189 : vector<1x1xf32>
    %262 = arith.select %261, %253, %244 : vector<1x1xi1>, vector<1x1xi32>
    %c1_i32_86 = arith.constant 1 : i32
    %263 = vector.broadcast %c1_i32_86 : i32 to vector<1x1xi32>
    %264 = arith.subi %253, %263 : vector<1x1xi32>
    %265 = arith.select %261, %247, %264 : vector<1x1xi1>, vector<1x1xi32>
    %c4_i32 = arith.constant 4 : i32
    %266 = arith.subi %265, %262 : vector<1x1xi32>
    %c1_i32_87 = arith.constant 1 : i32
    %267 = vector.broadcast %c1_i32_87 : i32 to vector<1x1xi32>
    %268 = arith.addi %266, %267 : vector<1x1xi32>
    %c1_i32_88 = arith.constant 1 : i32
    %269 = vector.broadcast %c1_i32_88 : i32 to vector<1x1xi32>
    %270 = arith.shrsi %268, %269 : vector<1x1xi32>
    %271 = arith.addi %262, %270 : vector<1x1xi32>
    %272 = vector.broadcast %271 : vector<1x1xi32> to vector<1x128xi32>
    %273 = arith.cmpi sge, %190, %272 : vector<1x128xi32>
    %cst_89 = arith.constant 1.000000e+00 : f32
    %cst_90 = arith.constant 0.000000e+00 : f32
    %274 = vector.broadcast %cst_89 : f32 to vector<1x128xf32>
    %275 = vector.broadcast %cst_90 : f32 to vector<1x128xf32>
    %276 = arith.select %273, %274, %275 : vector<1x128xi1>, vector<1x128xf32>
    %cst_91 = arith.constant dense<0.000000e+00> : vector<1xf32>
    %277 = vector.multi_reduction <add>, %276, %cst_91 [1] : vector<1x128xf32> to vector<1xf32>
    %278 = vector.shape_cast %277 : vector<1xf32> to vector<1x1xf32>
    %279 = arith.cmpf oge, %278, %189 : vector<1x1xf32>
    %280 = arith.select %279, %271, %262 : vector<1x1xi1>, vector<1x1xi32>
    %c1_i32_92 = arith.constant 1 : i32
    %281 = vector.broadcast %c1_i32_92 : i32 to vector<1x1xi32>
    %282 = arith.subi %271, %281 : vector<1x1xi32>
    %283 = arith.select %279, %265, %282 : vector<1x1xi1>, vector<1x1xi32>
    %c5_i32 = arith.constant 5 : i32
    %284 = arith.subi %283, %280 : vector<1x1xi32>
    %c1_i32_93 = arith.constant 1 : i32
    %285 = vector.broadcast %c1_i32_93 : i32 to vector<1x1xi32>
    %286 = arith.addi %284, %285 : vector<1x1xi32>
    %c1_i32_94 = arith.constant 1 : i32
    %287 = vector.broadcast %c1_i32_94 : i32 to vector<1x1xi32>
    %288 = arith.shrsi %286, %287 : vector<1x1xi32>
    %289 = arith.addi %280, %288 : vector<1x1xi32>
    %290 = vector.broadcast %289 : vector<1x1xi32> to vector<1x128xi32>
    %291 = arith.cmpi sge, %190, %290 : vector<1x128xi32>
    %cst_95 = arith.constant 1.000000e+00 : f32
    %cst_96 = arith.constant 0.000000e+00 : f32
    %292 = vector.broadcast %cst_95 : f32 to vector<1x128xf32>
    %293 = vector.broadcast %cst_96 : f32 to vector<1x128xf32>
    %294 = arith.select %291, %292, %293 : vector<1x128xi1>, vector<1x128xf32>
    %cst_97 = arith.constant dense<0.000000e+00> : vector<1xf32>
    %295 = vector.multi_reduction <add>, %294, %cst_97 [1] : vector<1x128xf32> to vector<1xf32>
    %296 = vector.shape_cast %295 : vector<1xf32> to vector<1x1xf32>
    %297 = arith.cmpf oge, %296, %189 : vector<1x1xf32>
    %298 = arith.select %297, %289, %280 : vector<1x1xi1>, vector<1x1xi32>
    %c1_i32_98 = arith.constant 1 : i32
    %299 = vector.broadcast %c1_i32_98 : i32 to vector<1x1xi32>
    %300 = arith.subi %289, %299 : vector<1x1xi32>
    %301 = arith.select %297, %283, %300 : vector<1x1xi1>, vector<1x1xi32>
    %c6_i32 = arith.constant 6 : i32
    %302 = arith.subi %301, %298 : vector<1x1xi32>
    %c1_i32_99 = arith.constant 1 : i32
    %303 = vector.broadcast %c1_i32_99 : i32 to vector<1x1xi32>
    %304 = arith.addi %302, %303 : vector<1x1xi32>
    %c1_i32_100 = arith.constant 1 : i32
    %305 = vector.broadcast %c1_i32_100 : i32 to vector<1x1xi32>
    %306 = arith.shrsi %304, %305 : vector<1x1xi32>
    %307 = arith.addi %298, %306 : vector<1x1xi32>
    %308 = vector.broadcast %307 : vector<1x1xi32> to vector<1x128xi32>
    %309 = arith.cmpi sge, %190, %308 : vector<1x128xi32>
    %cst_101 = arith.constant 1.000000e+00 : f32
    %cst_102 = arith.constant 0.000000e+00 : f32
    %310 = vector.broadcast %cst_101 : f32 to vector<1x128xf32>
    %311 = vector.broadcast %cst_102 : f32 to vector<1x128xf32>
    %312 = arith.select %309, %310, %311 : vector<1x128xi1>, vector<1x128xf32>
    %cst_103 = arith.constant dense<0.000000e+00> : vector<1xf32>
    %313 = vector.multi_reduction <add>, %312, %cst_103 [1] : vector<1x128xf32> to vector<1xf32>
    %314 = vector.shape_cast %313 : vector<1xf32> to vector<1x1xf32>
    %315 = arith.cmpf oge, %314, %189 : vector<1x1xf32>
    %316 = arith.select %315, %307, %298 : vector<1x1xi1>, vector<1x1xi32>
    %c1_i32_104 = arith.constant 1 : i32
    %317 = vector.broadcast %c1_i32_104 : i32 to vector<1x1xi32>
    %318 = arith.subi %307, %317 : vector<1x1xi32>
    %319 = arith.select %315, %301, %318 : vector<1x1xi1>, vector<1x1xi32>
    %c7_i32 = arith.constant 7 : i32
    %320 = arith.subi %319, %316 : vector<1x1xi32>
    %c1_i32_105 = arith.constant 1 : i32
    %321 = vector.broadcast %c1_i32_105 : i32 to vector<1x1xi32>
    %322 = arith.addi %320, %321 : vector<1x1xi32>
    %c1_i32_106 = arith.constant 1 : i32
    %323 = vector.broadcast %c1_i32_106 : i32 to vector<1x1xi32>
    %324 = arith.shrsi %322, %323 : vector<1x1xi32>
    %325 = arith.addi %316, %324 : vector<1x1xi32>
    %326 = vector.broadcast %325 : vector<1x1xi32> to vector<1x128xi32>
    %327 = arith.cmpi sge, %190, %326 : vector<1x128xi32>
    %cst_107 = arith.constant 1.000000e+00 : f32
    %cst_108 = arith.constant 0.000000e+00 : f32
    %328 = vector.broadcast %cst_107 : f32 to vector<1x128xf32>
    %329 = vector.broadcast %cst_108 : f32 to vector<1x128xf32>
    %330 = arith.select %327, %328, %329 : vector<1x128xi1>, vector<1x128xf32>
    %cst_109 = arith.constant dense<0.000000e+00> : vector<1xf32>
    %331 = vector.multi_reduction <add>, %330, %cst_109 [1] : vector<1x128xf32> to vector<1xf32>
    %332 = vector.shape_cast %331 : vector<1xf32> to vector<1x1xf32>
    %333 = arith.cmpf oge, %332, %189 : vector<1x1xf32>
    %334 = arith.select %333, %325, %316 : vector<1x1xi1>, vector<1x1xi32>
    %c1_i32_110 = arith.constant 1 : i32
    %335 = vector.broadcast %c1_i32_110 : i32 to vector<1x1xi32>
    %336 = arith.subi %325, %335 : vector<1x1xi32>
    %337 = arith.select %333, %319, %336 : vector<1x1xi1>, vector<1x1xi32>
    %c8_i32 = arith.constant 8 : i32
    %338 = arith.subi %337, %334 : vector<1x1xi32>
    %c1_i32_111 = arith.constant 1 : i32
    %339 = vector.broadcast %c1_i32_111 : i32 to vector<1x1xi32>
    %340 = arith.addi %338, %339 : vector<1x1xi32>
    %c1_i32_112 = arith.constant 1 : i32
    %341 = vector.broadcast %c1_i32_112 : i32 to vector<1x1xi32>
    %342 = arith.shrsi %340, %341 : vector<1x1xi32>
    %343 = arith.addi %334, %342 : vector<1x1xi32>
    %344 = vector.broadcast %343 : vector<1x1xi32> to vector<1x128xi32>
    %345 = arith.cmpi sge, %190, %344 : vector<1x128xi32>
    %cst_113 = arith.constant 1.000000e+00 : f32
    %cst_114 = arith.constant 0.000000e+00 : f32
    %346 = vector.broadcast %cst_113 : f32 to vector<1x128xf32>
    %347 = vector.broadcast %cst_114 : f32 to vector<1x128xf32>
    %348 = arith.select %345, %346, %347 : vector<1x128xi1>, vector<1x128xf32>
    %cst_115 = arith.constant dense<0.000000e+00> : vector<1xf32>
    %349 = vector.multi_reduction <add>, %348, %cst_115 [1] : vector<1x128xf32> to vector<1xf32>
    %350 = vector.shape_cast %349 : vector<1xf32> to vector<1x1xf32>
    %351 = arith.cmpf oge, %350, %189 : vector<1x1xf32>
    %352 = arith.select %351, %343, %334 : vector<1x1xi1>, vector<1x1xi32>
    %c1_i32_116 = arith.constant 1 : i32
    %353 = vector.broadcast %c1_i32_116 : i32 to vector<1x1xi32>
    %354 = arith.subi %343, %353 : vector<1x1xi32>
    %355 = arith.select %351, %337, %354 : vector<1x1xi1>, vector<1x1xi32>
    %c9_i32 = arith.constant 9 : i32
    %356 = arith.subi %355, %352 : vector<1x1xi32>
    %c1_i32_117 = arith.constant 1 : i32
    %357 = vector.broadcast %c1_i32_117 : i32 to vector<1x1xi32>
    %358 = arith.addi %356, %357 : vector<1x1xi32>
    %c1_i32_118 = arith.constant 1 : i32
    %359 = vector.broadcast %c1_i32_118 : i32 to vector<1x1xi32>
    %360 = arith.shrsi %358, %359 : vector<1x1xi32>
    %361 = arith.addi %352, %360 : vector<1x1xi32>
    %362 = vector.broadcast %361 : vector<1x1xi32> to vector<1x128xi32>
    %363 = arith.cmpi sge, %190, %362 : vector<1x128xi32>
    %cst_119 = arith.constant 1.000000e+00 : f32
    %cst_120 = arith.constant 0.000000e+00 : f32
    %364 = vector.broadcast %cst_119 : f32 to vector<1x128xf32>
    %365 = vector.broadcast %cst_120 : f32 to vector<1x128xf32>
    %366 = arith.select %363, %364, %365 : vector<1x128xi1>, vector<1x128xf32>
    %cst_121 = arith.constant dense<0.000000e+00> : vector<1xf32>
    %367 = vector.multi_reduction <add>, %366, %cst_121 [1] : vector<1x128xf32> to vector<1xf32>
    %368 = vector.shape_cast %367 : vector<1xf32> to vector<1x1xf32>
    %369 = arith.cmpf oge, %368, %189 : vector<1x1xf32>
    %370 = arith.select %369, %361, %352 : vector<1x1xi1>, vector<1x1xi32>
    %c1_i32_122 = arith.constant 1 : i32
    %371 = vector.broadcast %c1_i32_122 : i32 to vector<1x1xi32>
    %372 = arith.subi %361, %371 : vector<1x1xi32>
    %373 = arith.select %369, %355, %372 : vector<1x1xi1>, vector<1x1xi32>
    %c10_i32 = arith.constant 10 : i32
    %374 = arith.subi %373, %370 : vector<1x1xi32>
    %c1_i32_123 = arith.constant 1 : i32
    %375 = vector.broadcast %c1_i32_123 : i32 to vector<1x1xi32>
    %376 = arith.addi %374, %375 : vector<1x1xi32>
    %c1_i32_124 = arith.constant 1 : i32
    %377 = vector.broadcast %c1_i32_124 : i32 to vector<1x1xi32>
    %378 = arith.shrsi %376, %377 : vector<1x1xi32>
    %379 = arith.addi %370, %378 : vector<1x1xi32>
    %380 = vector.broadcast %379 : vector<1x1xi32> to vector<1x128xi32>
    %381 = arith.cmpi sge, %190, %380 : vector<1x128xi32>
    %cst_125 = arith.constant 1.000000e+00 : f32
    %cst_126 = arith.constant 0.000000e+00 : f32
    %382 = vector.broadcast %cst_125 : f32 to vector<1x128xf32>
    %383 = vector.broadcast %cst_126 : f32 to vector<1x128xf32>
    %384 = arith.select %381, %382, %383 : vector<1x128xi1>, vector<1x128xf32>
    %cst_127 = arith.constant dense<0.000000e+00> : vector<1xf32>
    %385 = vector.multi_reduction <add>, %384, %cst_127 [1] : vector<1x128xf32> to vector<1xf32>
    %386 = vector.shape_cast %385 : vector<1xf32> to vector<1x1xf32>
    %387 = arith.cmpf oge, %386, %189 : vector<1x1xf32>
    %388 = arith.select %387, %379, %370 : vector<1x1xi1>, vector<1x1xi32>
    %c1_i32_128 = arith.constant 1 : i32
    %389 = vector.broadcast %c1_i32_128 : i32 to vector<1x1xi32>
    %390 = arith.subi %379, %389 : vector<1x1xi32>
    %391 = arith.select %387, %373, %390 : vector<1x1xi1>, vector<1x1xi32>
    %c11_i32 = arith.constant 11 : i32
    %392 = arith.subi %391, %388 : vector<1x1xi32>
    %c1_i32_129 = arith.constant 1 : i32
    %393 = vector.broadcast %c1_i32_129 : i32 to vector<1x1xi32>
    %394 = arith.addi %392, %393 : vector<1x1xi32>
    %c1_i32_130 = arith.constant 1 : i32
    %395 = vector.broadcast %c1_i32_130 : i32 to vector<1x1xi32>
    %396 = arith.shrsi %394, %395 : vector<1x1xi32>
    %397 = arith.addi %388, %396 : vector<1x1xi32>
    %398 = vector.broadcast %397 : vector<1x1xi32> to vector<1x128xi32>
    %399 = arith.cmpi sge, %190, %398 : vector<1x128xi32>
    %cst_131 = arith.constant 1.000000e+00 : f32
    %cst_132 = arith.constant 0.000000e+00 : f32
    %400 = vector.broadcast %cst_131 : f32 to vector<1x128xf32>
    %401 = vector.broadcast %cst_132 : f32 to vector<1x128xf32>
    %402 = arith.select %399, %400, %401 : vector<1x128xi1>, vector<1x128xf32>
    %cst_133 = arith.constant dense<0.000000e+00> : vector<1xf32>
    %403 = vector.multi_reduction <add>, %402, %cst_133 [1] : vector<1x128xf32> to vector<1xf32>
    %404 = vector.shape_cast %403 : vector<1xf32> to vector<1x1xf32>
    %405 = arith.cmpf oge, %404, %189 : vector<1x1xf32>
    %406 = arith.select %405, %397, %388 : vector<1x1xi1>, vector<1x1xi32>
    %c1_i32_134 = arith.constant 1 : i32
    %407 = vector.broadcast %c1_i32_134 : i32 to vector<1x1xi32>
    %408 = arith.subi %397, %407 : vector<1x1xi32>
    %409 = arith.select %405, %391, %408 : vector<1x1xi1>, vector<1x1xi32>
    %c12_i32 = arith.constant 12 : i32
    %410 = arith.subi %409, %406 : vector<1x1xi32>
    %c1_i32_135 = arith.constant 1 : i32
    %411 = vector.broadcast %c1_i32_135 : i32 to vector<1x1xi32>
    %412 = arith.addi %410, %411 : vector<1x1xi32>
    %c1_i32_136 = arith.constant 1 : i32
    %413 = vector.broadcast %c1_i32_136 : i32 to vector<1x1xi32>
    %414 = arith.shrsi %412, %413 : vector<1x1xi32>
    %415 = arith.addi %406, %414 : vector<1x1xi32>
    %416 = vector.broadcast %415 : vector<1x1xi32> to vector<1x128xi32>
    %417 = arith.cmpi sge, %190, %416 : vector<1x128xi32>
    %cst_137 = arith.constant 1.000000e+00 : f32
    %cst_138 = arith.constant 0.000000e+00 : f32
    %418 = vector.broadcast %cst_137 : f32 to vector<1x128xf32>
    %419 = vector.broadcast %cst_138 : f32 to vector<1x128xf32>
    %420 = arith.select %417, %418, %419 : vector<1x128xi1>, vector<1x128xf32>
    %cst_139 = arith.constant dense<0.000000e+00> : vector<1xf32>
    %421 = vector.multi_reduction <add>, %420, %cst_139 [1] : vector<1x128xf32> to vector<1xf32>
    %422 = vector.shape_cast %421 : vector<1xf32> to vector<1x1xf32>
    %423 = arith.cmpf oge, %422, %189 : vector<1x1xf32>
    %424 = arith.select %423, %415, %406 : vector<1x1xi1>, vector<1x1xi32>
    %c1_i32_140 = arith.constant 1 : i32
    %425 = vector.broadcast %c1_i32_140 : i32 to vector<1x1xi32>
    %426 = arith.subi %415, %425 : vector<1x1xi32>
    %427 = arith.select %423, %409, %426 : vector<1x1xi1>, vector<1x1xi32>
    %c13_i32 = arith.constant 13 : i32
    %428 = arith.subi %427, %424 : vector<1x1xi32>
    %c1_i32_141 = arith.constant 1 : i32
    %429 = vector.broadcast %c1_i32_141 : i32 to vector<1x1xi32>
    %430 = arith.addi %428, %429 : vector<1x1xi32>
    %c1_i32_142 = arith.constant 1 : i32
    %431 = vector.broadcast %c1_i32_142 : i32 to vector<1x1xi32>
    %432 = arith.shrsi %430, %431 : vector<1x1xi32>
    %433 = arith.addi %424, %432 : vector<1x1xi32>
    %434 = vector.broadcast %433 : vector<1x1xi32> to vector<1x128xi32>
    %435 = arith.cmpi sge, %190, %434 : vector<1x128xi32>
    %cst_143 = arith.constant 1.000000e+00 : f32
    %cst_144 = arith.constant 0.000000e+00 : f32
    %436 = vector.broadcast %cst_143 : f32 to vector<1x128xf32>
    %437 = vector.broadcast %cst_144 : f32 to vector<1x128xf32>
    %438 = arith.select %435, %436, %437 : vector<1x128xi1>, vector<1x128xf32>
    %cst_145 = arith.constant dense<0.000000e+00> : vector<1xf32>
    %439 = vector.multi_reduction <add>, %438, %cst_145 [1] : vector<1x128xf32> to vector<1xf32>
    %440 = vector.shape_cast %439 : vector<1xf32> to vector<1x1xf32>
    %441 = arith.cmpf oge, %440, %189 : vector<1x1xf32>
    %442 = arith.select %441, %433, %424 : vector<1x1xi1>, vector<1x1xi32>
    %c1_i32_146 = arith.constant 1 : i32
    %443 = vector.broadcast %c1_i32_146 : i32 to vector<1x1xi32>
    %444 = arith.subi %433, %443 : vector<1x1xi32>
    %445 = arith.select %441, %427, %444 : vector<1x1xi1>, vector<1x1xi32>
    %c14_i32 = arith.constant 14 : i32
    %446 = arith.subi %445, %442 : vector<1x1xi32>
    %c1_i32_147 = arith.constant 1 : i32
    %447 = vector.broadcast %c1_i32_147 : i32 to vector<1x1xi32>
    %448 = arith.addi %446, %447 : vector<1x1xi32>
    %c1_i32_148 = arith.constant 1 : i32
    %449 = vector.broadcast %c1_i32_148 : i32 to vector<1x1xi32>
    %450 = arith.shrsi %448, %449 : vector<1x1xi32>
    %451 = arith.addi %442, %450 : vector<1x1xi32>
    %452 = vector.broadcast %451 : vector<1x1xi32> to vector<1x128xi32>
    %453 = arith.cmpi sge, %190, %452 : vector<1x128xi32>
    %cst_149 = arith.constant 1.000000e+00 : f32
    %cst_150 = arith.constant 0.000000e+00 : f32
    %454 = vector.broadcast %cst_149 : f32 to vector<1x128xf32>
    %455 = vector.broadcast %cst_150 : f32 to vector<1x128xf32>
    %456 = arith.select %453, %454, %455 : vector<1x128xi1>, vector<1x128xf32>
    %cst_151 = arith.constant dense<0.000000e+00> : vector<1xf32>
    %457 = vector.multi_reduction <add>, %456, %cst_151 [1] : vector<1x128xf32> to vector<1xf32>
    %458 = vector.shape_cast %457 : vector<1xf32> to vector<1x1xf32>
    %459 = arith.cmpf oge, %458, %189 : vector<1x1xf32>
    %460 = arith.select %459, %451, %442 : vector<1x1xi1>, vector<1x1xi32>
    %c1_i32_152 = arith.constant 1 : i32
    %461 = vector.broadcast %c1_i32_152 : i32 to vector<1x1xi32>
    %462 = arith.subi %451, %461 : vector<1x1xi32>
    %463 = arith.select %459, %445, %462 : vector<1x1xi1>, vector<1x1xi32>
    %c15_i32 = arith.constant 15 : i32
    %464 = arith.subi %463, %460 : vector<1x1xi32>
    %c1_i32_153 = arith.constant 1 : i32
    %465 = vector.broadcast %c1_i32_153 : i32 to vector<1x1xi32>
    %466 = arith.addi %464, %465 : vector<1x1xi32>
    %c1_i32_154 = arith.constant 1 : i32
    %467 = vector.broadcast %c1_i32_154 : i32 to vector<1x1xi32>
    %468 = arith.shrsi %466, %467 : vector<1x1xi32>
    %469 = arith.addi %460, %468 : vector<1x1xi32>
    %470 = vector.broadcast %469 : vector<1x1xi32> to vector<1x128xi32>
    %471 = arith.cmpi sge, %190, %470 : vector<1x128xi32>
    %cst_155 = arith.constant 1.000000e+00 : f32
    %cst_156 = arith.constant 0.000000e+00 : f32
    %472 = vector.broadcast %cst_155 : f32 to vector<1x128xf32>
    %473 = vector.broadcast %cst_156 : f32 to vector<1x128xf32>
    %474 = arith.select %471, %472, %473 : vector<1x128xi1>, vector<1x128xf32>
    %cst_157 = arith.constant dense<0.000000e+00> : vector<1xf32>
    %475 = vector.multi_reduction <add>, %474, %cst_157 [1] : vector<1x128xf32> to vector<1xf32>
    %476 = vector.shape_cast %475 : vector<1xf32> to vector<1x1xf32>
    %477 = arith.cmpf oge, %476, %189 : vector<1x1xf32>
    %478 = arith.select %477, %469, %460 : vector<1x1xi1>, vector<1x1xi32>
    %c1_i32_158 = arith.constant 1 : i32
    %479 = vector.broadcast %c1_i32_158 : i32 to vector<1x1xi32>
    %480 = arith.subi %469, %479 : vector<1x1xi32>
    %481 = arith.select %477, %463, %480 : vector<1x1xi1>, vector<1x1xi32>
    %c16_i32 = arith.constant 16 : i32
    %482 = arith.subi %481, %478 : vector<1x1xi32>
    %c1_i32_159 = arith.constant 1 : i32
    %483 = vector.broadcast %c1_i32_159 : i32 to vector<1x1xi32>
    %484 = arith.addi %482, %483 : vector<1x1xi32>
    %c1_i32_160 = arith.constant 1 : i32
    %485 = vector.broadcast %c1_i32_160 : i32 to vector<1x1xi32>
    %486 = arith.shrsi %484, %485 : vector<1x1xi32>
    %487 = arith.addi %478, %486 : vector<1x1xi32>
    %488 = vector.broadcast %487 : vector<1x1xi32> to vector<1x128xi32>
    %489 = arith.cmpi sge, %190, %488 : vector<1x128xi32>
    %cst_161 = arith.constant 1.000000e+00 : f32
    %cst_162 = arith.constant 0.000000e+00 : f32
    %490 = vector.broadcast %cst_161 : f32 to vector<1x128xf32>
    %491 = vector.broadcast %cst_162 : f32 to vector<1x128xf32>
    %492 = arith.select %489, %490, %491 : vector<1x128xi1>, vector<1x128xf32>
    %cst_163 = arith.constant dense<0.000000e+00> : vector<1xf32>
    %493 = vector.multi_reduction <add>, %492, %cst_163 [1] : vector<1x128xf32> to vector<1xf32>
    %494 = vector.shape_cast %493 : vector<1xf32> to vector<1x1xf32>
    %495 = arith.cmpf oge, %494, %189 : vector<1x1xf32>
    %496 = arith.select %495, %487, %478 : vector<1x1xi1>, vector<1x1xi32>
    %c1_i32_164 = arith.constant 1 : i32
    %497 = vector.broadcast %c1_i32_164 : i32 to vector<1x1xi32>
    %498 = arith.subi %487, %497 : vector<1x1xi32>
    %499 = arith.select %495, %481, %498 : vector<1x1xi1>, vector<1x1xi32>
    %c17_i32 = arith.constant 17 : i32
    %500 = arith.subi %499, %496 : vector<1x1xi32>
    %c1_i32_165 = arith.constant 1 : i32
    %501 = vector.broadcast %c1_i32_165 : i32 to vector<1x1xi32>
    %502 = arith.addi %500, %501 : vector<1x1xi32>
    %c1_i32_166 = arith.constant 1 : i32
    %503 = vector.broadcast %c1_i32_166 : i32 to vector<1x1xi32>
    %504 = arith.shrsi %502, %503 : vector<1x1xi32>
    %505 = arith.addi %496, %504 : vector<1x1xi32>
    %506 = vector.broadcast %505 : vector<1x1xi32> to vector<1x128xi32>
    %507 = arith.cmpi sge, %190, %506 : vector<1x128xi32>
    %cst_167 = arith.constant 1.000000e+00 : f32
    %cst_168 = arith.constant 0.000000e+00 : f32
    %508 = vector.broadcast %cst_167 : f32 to vector<1x128xf32>
    %509 = vector.broadcast %cst_168 : f32 to vector<1x128xf32>
    %510 = arith.select %507, %508, %509 : vector<1x128xi1>, vector<1x128xf32>
    %cst_169 = arith.constant dense<0.000000e+00> : vector<1xf32>
    %511 = vector.multi_reduction <add>, %510, %cst_169 [1] : vector<1x128xf32> to vector<1xf32>
    %512 = vector.shape_cast %511 : vector<1xf32> to vector<1x1xf32>
    %513 = arith.cmpf oge, %512, %189 : vector<1x1xf32>
    %514 = arith.select %513, %505, %496 : vector<1x1xi1>, vector<1x1xi32>
    %c1_i32_170 = arith.constant 1 : i32
    %515 = vector.broadcast %c1_i32_170 : i32 to vector<1x1xi32>
    %516 = arith.subi %505, %515 : vector<1x1xi32>
    %517 = arith.select %513, %499, %516 : vector<1x1xi1>, vector<1x1xi32>
    %c18_i32 = arith.constant 18 : i32
    %518 = arith.subi %517, %514 : vector<1x1xi32>
    %c1_i32_171 = arith.constant 1 : i32
    %519 = vector.broadcast %c1_i32_171 : i32 to vector<1x1xi32>
    %520 = arith.addi %518, %519 : vector<1x1xi32>
    %c1_i32_172 = arith.constant 1 : i32
    %521 = vector.broadcast %c1_i32_172 : i32 to vector<1x1xi32>
    %522 = arith.shrsi %520, %521 : vector<1x1xi32>
    %523 = arith.addi %514, %522 : vector<1x1xi32>
    %524 = vector.broadcast %523 : vector<1x1xi32> to vector<1x128xi32>
    %525 = arith.cmpi sge, %190, %524 : vector<1x128xi32>
    %cst_173 = arith.constant 1.000000e+00 : f32
    %cst_174 = arith.constant 0.000000e+00 : f32
    %526 = vector.broadcast %cst_173 : f32 to vector<1x128xf32>
    %527 = vector.broadcast %cst_174 : f32 to vector<1x128xf32>
    %528 = arith.select %525, %526, %527 : vector<1x128xi1>, vector<1x128xf32>
    %cst_175 = arith.constant dense<0.000000e+00> : vector<1xf32>
    %529 = vector.multi_reduction <add>, %528, %cst_175 [1] : vector<1x128xf32> to vector<1xf32>
    %530 = vector.shape_cast %529 : vector<1xf32> to vector<1x1xf32>
    %531 = arith.cmpf oge, %530, %189 : vector<1x1xf32>
    %532 = arith.select %531, %523, %514 : vector<1x1xi1>, vector<1x1xi32>
    %c1_i32_176 = arith.constant 1 : i32
    %533 = vector.broadcast %c1_i32_176 : i32 to vector<1x1xi32>
    %534 = arith.subi %523, %533 : vector<1x1xi32>
    %535 = arith.select %531, %517, %534 : vector<1x1xi1>, vector<1x1xi32>
    %c19_i32 = arith.constant 19 : i32
    %536 = arith.subi %535, %532 : vector<1x1xi32>
    %c1_i32_177 = arith.constant 1 : i32
    %537 = vector.broadcast %c1_i32_177 : i32 to vector<1x1xi32>
    %538 = arith.addi %536, %537 : vector<1x1xi32>
    %c1_i32_178 = arith.constant 1 : i32
    %539 = vector.broadcast %c1_i32_178 : i32 to vector<1x1xi32>
    %540 = arith.shrsi %538, %539 : vector<1x1xi32>
    %541 = arith.addi %532, %540 : vector<1x1xi32>
    %542 = vector.broadcast %541 : vector<1x1xi32> to vector<1x128xi32>
    %543 = arith.cmpi sge, %190, %542 : vector<1x128xi32>
    %cst_179 = arith.constant 1.000000e+00 : f32
    %cst_180 = arith.constant 0.000000e+00 : f32
    %544 = vector.broadcast %cst_179 : f32 to vector<1x128xf32>
    %545 = vector.broadcast %cst_180 : f32 to vector<1x128xf32>
    %546 = arith.select %543, %544, %545 : vector<1x128xi1>, vector<1x128xf32>
    %cst_181 = arith.constant dense<0.000000e+00> : vector<1xf32>
    %547 = vector.multi_reduction <add>, %546, %cst_181 [1] : vector<1x128xf32> to vector<1xf32>
    %548 = vector.shape_cast %547 : vector<1xf32> to vector<1x1xf32>
    %549 = arith.cmpf oge, %548, %189 : vector<1x1xf32>
    %550 = arith.select %549, %541, %532 : vector<1x1xi1>, vector<1x1xi32>
    %c1_i32_182 = arith.constant 1 : i32
    %551 = vector.broadcast %c1_i32_182 : i32 to vector<1x1xi32>
    %552 = arith.subi %541, %551 : vector<1x1xi32>
    %553 = arith.select %549, %535, %552 : vector<1x1xi1>, vector<1x1xi32>
    %c20_i32 = arith.constant 20 : i32
    %554 = arith.subi %553, %550 : vector<1x1xi32>
    %c1_i32_183 = arith.constant 1 : i32
    %555 = vector.broadcast %c1_i32_183 : i32 to vector<1x1xi32>
    %556 = arith.addi %554, %555 : vector<1x1xi32>
    %c1_i32_184 = arith.constant 1 : i32
    %557 = vector.broadcast %c1_i32_184 : i32 to vector<1x1xi32>
    %558 = arith.shrsi %556, %557 : vector<1x1xi32>
    %559 = arith.addi %550, %558 : vector<1x1xi32>
    %560 = vector.broadcast %559 : vector<1x1xi32> to vector<1x128xi32>
    %561 = arith.cmpi sge, %190, %560 : vector<1x128xi32>
    %cst_185 = arith.constant 1.000000e+00 : f32
    %cst_186 = arith.constant 0.000000e+00 : f32
    %562 = vector.broadcast %cst_185 : f32 to vector<1x128xf32>
    %563 = vector.broadcast %cst_186 : f32 to vector<1x128xf32>
    %564 = arith.select %561, %562, %563 : vector<1x128xi1>, vector<1x128xf32>
    %cst_187 = arith.constant dense<0.000000e+00> : vector<1xf32>
    %565 = vector.multi_reduction <add>, %564, %cst_187 [1] : vector<1x128xf32> to vector<1xf32>
    %566 = vector.shape_cast %565 : vector<1xf32> to vector<1x1xf32>
    %567 = arith.cmpf oge, %566, %189 : vector<1x1xf32>
    %568 = arith.select %567, %559, %550 : vector<1x1xi1>, vector<1x1xi32>
    %c1_i32_188 = arith.constant 1 : i32
    %569 = vector.broadcast %c1_i32_188 : i32 to vector<1x1xi32>
    %570 = arith.subi %559, %569 : vector<1x1xi32>
    %571 = arith.select %567, %553, %570 : vector<1x1xi1>, vector<1x1xi32>
    %c21_i32 = arith.constant 21 : i32
    %572 = arith.subi %571, %568 : vector<1x1xi32>
    %c1_i32_189 = arith.constant 1 : i32
    %573 = vector.broadcast %c1_i32_189 : i32 to vector<1x1xi32>
    %574 = arith.addi %572, %573 : vector<1x1xi32>
    %c1_i32_190 = arith.constant 1 : i32
    %575 = vector.broadcast %c1_i32_190 : i32 to vector<1x1xi32>
    %576 = arith.shrsi %574, %575 : vector<1x1xi32>
    %577 = arith.addi %568, %576 : vector<1x1xi32>
    %578 = vector.broadcast %577 : vector<1x1xi32> to vector<1x128xi32>
    %579 = arith.cmpi sge, %190, %578 : vector<1x128xi32>
    %cst_191 = arith.constant 1.000000e+00 : f32
    %cst_192 = arith.constant 0.000000e+00 : f32
    %580 = vector.broadcast %cst_191 : f32 to vector<1x128xf32>
    %581 = vector.broadcast %cst_192 : f32 to vector<1x128xf32>
    %582 = arith.select %579, %580, %581 : vector<1x128xi1>, vector<1x128xf32>
    %cst_193 = arith.constant dense<0.000000e+00> : vector<1xf32>
    %583 = vector.multi_reduction <add>, %582, %cst_193 [1] : vector<1x128xf32> to vector<1xf32>
    %584 = vector.shape_cast %583 : vector<1xf32> to vector<1x1xf32>
    %585 = arith.cmpf oge, %584, %189 : vector<1x1xf32>
    %586 = arith.select %585, %577, %568 : vector<1x1xi1>, vector<1x1xi32>
    %c1_i32_194 = arith.constant 1 : i32
    %587 = vector.broadcast %c1_i32_194 : i32 to vector<1x1xi32>
    %588 = arith.subi %577, %587 : vector<1x1xi32>
    %589 = arith.select %585, %571, %588 : vector<1x1xi1>, vector<1x1xi32>
    %c22_i32 = arith.constant 22 : i32
    %590 = arith.subi %589, %586 : vector<1x1xi32>
    %c1_i32_195 = arith.constant 1 : i32
    %591 = vector.broadcast %c1_i32_195 : i32 to vector<1x1xi32>
    %592 = arith.addi %590, %591 : vector<1x1xi32>
    %c1_i32_196 = arith.constant 1 : i32
    %593 = vector.broadcast %c1_i32_196 : i32 to vector<1x1xi32>
    %594 = arith.shrsi %592, %593 : vector<1x1xi32>
    %595 = arith.addi %586, %594 : vector<1x1xi32>
    %596 = vector.broadcast %595 : vector<1x1xi32> to vector<1x128xi32>
    %597 = arith.cmpi sge, %190, %596 : vector<1x128xi32>
    %cst_197 = arith.constant 1.000000e+00 : f32
    %cst_198 = arith.constant 0.000000e+00 : f32
    %598 = vector.broadcast %cst_197 : f32 to vector<1x128xf32>
    %599 = vector.broadcast %cst_198 : f32 to vector<1x128xf32>
    %600 = arith.select %597, %598, %599 : vector<1x128xi1>, vector<1x128xf32>
    %cst_199 = arith.constant dense<0.000000e+00> : vector<1xf32>
    %601 = vector.multi_reduction <add>, %600, %cst_199 [1] : vector<1x128xf32> to vector<1xf32>
    %602 = vector.shape_cast %601 : vector<1xf32> to vector<1x1xf32>
    %603 = arith.cmpf oge, %602, %189 : vector<1x1xf32>
    %604 = arith.select %603, %595, %586 : vector<1x1xi1>, vector<1x1xi32>
    %c1_i32_200 = arith.constant 1 : i32
    %605 = vector.broadcast %c1_i32_200 : i32 to vector<1x1xi32>
    %606 = arith.subi %595, %605 : vector<1x1xi32>
    %607 = arith.select %603, %589, %606 : vector<1x1xi1>, vector<1x1xi32>
    %c23_i32 = arith.constant 23 : i32
    %608 = arith.subi %607, %604 : vector<1x1xi32>
    %c1_i32_201 = arith.constant 1 : i32
    %609 = vector.broadcast %c1_i32_201 : i32 to vector<1x1xi32>
    %610 = arith.addi %608, %609 : vector<1x1xi32>
    %c1_i32_202 = arith.constant 1 : i32
    %611 = vector.broadcast %c1_i32_202 : i32 to vector<1x1xi32>
    %612 = arith.shrsi %610, %611 : vector<1x1xi32>
    %613 = arith.addi %604, %612 : vector<1x1xi32>
    %614 = vector.broadcast %613 : vector<1x1xi32> to vector<1x128xi32>
    %615 = arith.cmpi sge, %190, %614 : vector<1x128xi32>
    %cst_203 = arith.constant 1.000000e+00 : f32
    %cst_204 = arith.constant 0.000000e+00 : f32
    %616 = vector.broadcast %cst_203 : f32 to vector<1x128xf32>
    %617 = vector.broadcast %cst_204 : f32 to vector<1x128xf32>
    %618 = arith.select %615, %616, %617 : vector<1x128xi1>, vector<1x128xf32>
    %cst_205 = arith.constant dense<0.000000e+00> : vector<1xf32>
    %619 = vector.multi_reduction <add>, %618, %cst_205 [1] : vector<1x128xf32> to vector<1xf32>
    %620 = vector.shape_cast %619 : vector<1xf32> to vector<1x1xf32>
    %621 = arith.cmpf oge, %620, %189 : vector<1x1xf32>
    %622 = arith.select %621, %613, %604 : vector<1x1xi1>, vector<1x1xi32>
    %c1_i32_206 = arith.constant 1 : i32
    %623 = vector.broadcast %c1_i32_206 : i32 to vector<1x1xi32>
    %624 = arith.subi %613, %623 : vector<1x1xi32>
    %625 = arith.select %621, %607, %624 : vector<1x1xi1>, vector<1x1xi32>
    %c24_i32 = arith.constant 24 : i32
    %626 = arith.subi %625, %622 : vector<1x1xi32>
    %c1_i32_207 = arith.constant 1 : i32
    %627 = vector.broadcast %c1_i32_207 : i32 to vector<1x1xi32>
    %628 = arith.addi %626, %627 : vector<1x1xi32>
    %c1_i32_208 = arith.constant 1 : i32
    %629 = vector.broadcast %c1_i32_208 : i32 to vector<1x1xi32>
    %630 = arith.shrsi %628, %629 : vector<1x1xi32>
    %631 = arith.addi %622, %630 : vector<1x1xi32>
    %632 = vector.broadcast %631 : vector<1x1xi32> to vector<1x128xi32>
    %633 = arith.cmpi sge, %190, %632 : vector<1x128xi32>
    %cst_209 = arith.constant 1.000000e+00 : f32
    %cst_210 = arith.constant 0.000000e+00 : f32
    %634 = vector.broadcast %cst_209 : f32 to vector<1x128xf32>
    %635 = vector.broadcast %cst_210 : f32 to vector<1x128xf32>
    %636 = arith.select %633, %634, %635 : vector<1x128xi1>, vector<1x128xf32>
    %cst_211 = arith.constant dense<0.000000e+00> : vector<1xf32>
    %637 = vector.multi_reduction <add>, %636, %cst_211 [1] : vector<1x128xf32> to vector<1xf32>
    %638 = vector.shape_cast %637 : vector<1xf32> to vector<1x1xf32>
    %639 = arith.cmpf oge, %638, %189 : vector<1x1xf32>
    %640 = arith.select %639, %631, %622 : vector<1x1xi1>, vector<1x1xi32>
    %c1_i32_212 = arith.constant 1 : i32
    %641 = vector.broadcast %c1_i32_212 : i32 to vector<1x1xi32>
    %642 = arith.subi %631, %641 : vector<1x1xi32>
    %643 = arith.select %639, %625, %642 : vector<1x1xi1>, vector<1x1xi32>
    %c25_i32 = arith.constant 25 : i32
    %644 = arith.subi %643, %640 : vector<1x1xi32>
    %c1_i32_213 = arith.constant 1 : i32
    %645 = vector.broadcast %c1_i32_213 : i32 to vector<1x1xi32>
    %646 = arith.addi %644, %645 : vector<1x1xi32>
    %c1_i32_214 = arith.constant 1 : i32
    %647 = vector.broadcast %c1_i32_214 : i32 to vector<1x1xi32>
    %648 = arith.shrsi %646, %647 : vector<1x1xi32>
    %649 = arith.addi %640, %648 : vector<1x1xi32>
    %650 = vector.broadcast %649 : vector<1x1xi32> to vector<1x128xi32>
    %651 = arith.cmpi sge, %190, %650 : vector<1x128xi32>
    %cst_215 = arith.constant 1.000000e+00 : f32
    %cst_216 = arith.constant 0.000000e+00 : f32
    %652 = vector.broadcast %cst_215 : f32 to vector<1x128xf32>
    %653 = vector.broadcast %cst_216 : f32 to vector<1x128xf32>
    %654 = arith.select %651, %652, %653 : vector<1x128xi1>, vector<1x128xf32>
    %cst_217 = arith.constant dense<0.000000e+00> : vector<1xf32>
    %655 = vector.multi_reduction <add>, %654, %cst_217 [1] : vector<1x128xf32> to vector<1xf32>
    %656 = vector.shape_cast %655 : vector<1xf32> to vector<1x1xf32>
    %657 = arith.cmpf oge, %656, %189 : vector<1x1xf32>
    %658 = arith.select %657, %649, %640 : vector<1x1xi1>, vector<1x1xi32>
    %c1_i32_218 = arith.constant 1 : i32
    %659 = vector.broadcast %c1_i32_218 : i32 to vector<1x1xi32>
    %660 = arith.subi %649, %659 : vector<1x1xi32>
    %661 = arith.select %657, %643, %660 : vector<1x1xi1>, vector<1x1xi32>
    %c26_i32 = arith.constant 26 : i32
    %662 = arith.subi %661, %658 : vector<1x1xi32>
    %c1_i32_219 = arith.constant 1 : i32
    %663 = vector.broadcast %c1_i32_219 : i32 to vector<1x1xi32>
    %664 = arith.addi %662, %663 : vector<1x1xi32>
    %c1_i32_220 = arith.constant 1 : i32
    %665 = vector.broadcast %c1_i32_220 : i32 to vector<1x1xi32>
    %666 = arith.shrsi %664, %665 : vector<1x1xi32>
    %667 = arith.addi %658, %666 : vector<1x1xi32>
    %668 = vector.broadcast %667 : vector<1x1xi32> to vector<1x128xi32>
    %669 = arith.cmpi sge, %190, %668 : vector<1x128xi32>
    %cst_221 = arith.constant 1.000000e+00 : f32
    %cst_222 = arith.constant 0.000000e+00 : f32
    %670 = vector.broadcast %cst_221 : f32 to vector<1x128xf32>
    %671 = vector.broadcast %cst_222 : f32 to vector<1x128xf32>
    %672 = arith.select %669, %670, %671 : vector<1x128xi1>, vector<1x128xf32>
    %cst_223 = arith.constant dense<0.000000e+00> : vector<1xf32>
    %673 = vector.multi_reduction <add>, %672, %cst_223 [1] : vector<1x128xf32> to vector<1xf32>
    %674 = vector.shape_cast %673 : vector<1xf32> to vector<1x1xf32>
    %675 = arith.cmpf oge, %674, %189 : vector<1x1xf32>
    %676 = arith.select %675, %667, %658 : vector<1x1xi1>, vector<1x1xi32>
    %c1_i32_224 = arith.constant 1 : i32
    %677 = vector.broadcast %c1_i32_224 : i32 to vector<1x1xi32>
    %678 = arith.subi %667, %677 : vector<1x1xi32>
    %679 = arith.select %675, %661, %678 : vector<1x1xi1>, vector<1x1xi32>
    %c27_i32 = arith.constant 27 : i32
    %680 = arith.subi %679, %676 : vector<1x1xi32>
    %c1_i32_225 = arith.constant 1 : i32
    %681 = vector.broadcast %c1_i32_225 : i32 to vector<1x1xi32>
    %682 = arith.addi %680, %681 : vector<1x1xi32>
    %c1_i32_226 = arith.constant 1 : i32
    %683 = vector.broadcast %c1_i32_226 : i32 to vector<1x1xi32>
    %684 = arith.shrsi %682, %683 : vector<1x1xi32>
    %685 = arith.addi %676, %684 : vector<1x1xi32>
    %686 = vector.broadcast %685 : vector<1x1xi32> to vector<1x128xi32>
    %687 = arith.cmpi sge, %190, %686 : vector<1x128xi32>
    %cst_227 = arith.constant 1.000000e+00 : f32
    %cst_228 = arith.constant 0.000000e+00 : f32
    %688 = vector.broadcast %cst_227 : f32 to vector<1x128xf32>
    %689 = vector.broadcast %cst_228 : f32 to vector<1x128xf32>
    %690 = arith.select %687, %688, %689 : vector<1x128xi1>, vector<1x128xf32>
    %cst_229 = arith.constant dense<0.000000e+00> : vector<1xf32>
    %691 = vector.multi_reduction <add>, %690, %cst_229 [1] : vector<1x128xf32> to vector<1xf32>
    %692 = vector.shape_cast %691 : vector<1xf32> to vector<1x1xf32>
    %693 = arith.cmpf oge, %692, %189 : vector<1x1xf32>
    %694 = arith.select %693, %685, %676 : vector<1x1xi1>, vector<1x1xi32>
    %c1_i32_230 = arith.constant 1 : i32
    %695 = vector.broadcast %c1_i32_230 : i32 to vector<1x1xi32>
    %696 = arith.subi %685, %695 : vector<1x1xi32>
    %697 = arith.select %693, %679, %696 : vector<1x1xi1>, vector<1x1xi32>
    %c28_i32 = arith.constant 28 : i32
    %698 = arith.subi %697, %694 : vector<1x1xi32>
    %c1_i32_231 = arith.constant 1 : i32
    %699 = vector.broadcast %c1_i32_231 : i32 to vector<1x1xi32>
    %700 = arith.addi %698, %699 : vector<1x1xi32>
    %c1_i32_232 = arith.constant 1 : i32
    %701 = vector.broadcast %c1_i32_232 : i32 to vector<1x1xi32>
    %702 = arith.shrsi %700, %701 : vector<1x1xi32>
    %703 = arith.addi %694, %702 : vector<1x1xi32>
    %704 = vector.broadcast %703 : vector<1x1xi32> to vector<1x128xi32>
    %705 = arith.cmpi sge, %190, %704 : vector<1x128xi32>
    %cst_233 = arith.constant 1.000000e+00 : f32
    %cst_234 = arith.constant 0.000000e+00 : f32
    %706 = vector.broadcast %cst_233 : f32 to vector<1x128xf32>
    %707 = vector.broadcast %cst_234 : f32 to vector<1x128xf32>
    %708 = arith.select %705, %706, %707 : vector<1x128xi1>, vector<1x128xf32>
    %cst_235 = arith.constant dense<0.000000e+00> : vector<1xf32>
    %709 = vector.multi_reduction <add>, %708, %cst_235 [1] : vector<1x128xf32> to vector<1xf32>
    %710 = vector.shape_cast %709 : vector<1xf32> to vector<1x1xf32>
    %711 = arith.cmpf oge, %710, %189 : vector<1x1xf32>
    %712 = arith.select %711, %703, %694 : vector<1x1xi1>, vector<1x1xi32>
    %c1_i32_236 = arith.constant 1 : i32
    %713 = vector.broadcast %c1_i32_236 : i32 to vector<1x1xi32>
    %714 = arith.subi %703, %713 : vector<1x1xi32>
    %715 = arith.select %711, %697, %714 : vector<1x1xi1>, vector<1x1xi32>
    %c29_i32 = arith.constant 29 : i32
    %716 = arith.subi %715, %712 : vector<1x1xi32>
    %c1_i32_237 = arith.constant 1 : i32
    %717 = vector.broadcast %c1_i32_237 : i32 to vector<1x1xi32>
    %718 = arith.addi %716, %717 : vector<1x1xi32>
    %c1_i32_238 = arith.constant 1 : i32
    %719 = vector.broadcast %c1_i32_238 : i32 to vector<1x1xi32>
    %720 = arith.shrsi %718, %719 : vector<1x1xi32>
    %721 = arith.addi %712, %720 : vector<1x1xi32>
    %722 = vector.broadcast %721 : vector<1x1xi32> to vector<1x128xi32>
    %723 = arith.cmpi sge, %190, %722 : vector<1x128xi32>
    %cst_239 = arith.constant 1.000000e+00 : f32
    %cst_240 = arith.constant 0.000000e+00 : f32
    %724 = vector.broadcast %cst_239 : f32 to vector<1x128xf32>
    %725 = vector.broadcast %cst_240 : f32 to vector<1x128xf32>
    %726 = arith.select %723, %724, %725 : vector<1x128xi1>, vector<1x128xf32>
    %cst_241 = arith.constant dense<0.000000e+00> : vector<1xf32>
    %727 = vector.multi_reduction <add>, %726, %cst_241 [1] : vector<1x128xf32> to vector<1xf32>
    %728 = vector.shape_cast %727 : vector<1xf32> to vector<1x1xf32>
    %729 = arith.cmpf oge, %728, %189 : vector<1x1xf32>
    %730 = arith.select %729, %721, %712 : vector<1x1xi1>, vector<1x1xi32>
    %c1_i32_242 = arith.constant 1 : i32
    %731 = vector.broadcast %c1_i32_242 : i32 to vector<1x1xi32>
    %732 = arith.subi %721, %731 : vector<1x1xi32>
    %733 = arith.select %729, %715, %732 : vector<1x1xi1>, vector<1x1xi32>
    %c30_i32 = arith.constant 30 : i32
    %734 = arith.subi %733, %730 : vector<1x1xi32>
    %c1_i32_243 = arith.constant 1 : i32
    %735 = vector.broadcast %c1_i32_243 : i32 to vector<1x1xi32>
    %736 = arith.addi %734, %735 : vector<1x1xi32>
    %c1_i32_244 = arith.constant 1 : i32
    %737 = vector.broadcast %c1_i32_244 : i32 to vector<1x1xi32>
    %738 = arith.shrsi %736, %737 : vector<1x1xi32>
    %739 = arith.addi %730, %738 : vector<1x1xi32>
    %740 = vector.broadcast %739 : vector<1x1xi32> to vector<1x128xi32>
    %741 = arith.cmpi sge, %190, %740 : vector<1x128xi32>
    %cst_245 = arith.constant 1.000000e+00 : f32
    %cst_246 = arith.constant 0.000000e+00 : f32
    %742 = vector.broadcast %cst_245 : f32 to vector<1x128xf32>
    %743 = vector.broadcast %cst_246 : f32 to vector<1x128xf32>
    %744 = arith.select %741, %742, %743 : vector<1x128xi1>, vector<1x128xf32>
    %cst_247 = arith.constant dense<0.000000e+00> : vector<1xf32>
    %745 = vector.multi_reduction <add>, %744, %cst_247 [1] : vector<1x128xf32> to vector<1xf32>
    %746 = vector.shape_cast %745 : vector<1xf32> to vector<1x1xf32>
    %747 = arith.cmpf oge, %746, %189 : vector<1x1xf32>
    %748 = arith.select %747, %739, %730 : vector<1x1xi1>, vector<1x1xi32>
    %c1_i32_248 = arith.constant 1 : i32
    %749 = vector.broadcast %c1_i32_248 : i32 to vector<1x1xi32>
    %750 = arith.subi %739, %749 : vector<1x1xi32>
    %751 = arith.select %747, %733, %750 : vector<1x1xi1>, vector<1x1xi32>
    %752 = tpu.bitcast %748 : vector<1x1xi32> -> vector<1x1xf32>
    %753 = vector.broadcast %752 : vector<1x1xf32> to vector<1x128xf32>
    %754 = arith.cmpf ogt, %180, %753 : vector<1x128xf32>
    %cst_249 = arith.constant 1.000000e+00 : f32
    %cst_250 = arith.constant 0.000000e+00 : f32
    %755 = vector.broadcast %cst_249 : f32 to vector<1x128xf32>
    %756 = vector.broadcast %cst_250 : f32 to vector<1x128xf32>
    %757 = arith.select %754, %755, %756 : vector<1x128xi1>, vector<1x128xf32>
    %cst_251 = arith.constant dense<0.000000e+00> : vector<1xf32>
    %758 = vector.multi_reduction <add>, %757, %cst_251 [1] : vector<1x128xf32> to vector<1xf32>
    %759 = vector.shape_cast %758 : vector<1xf32> to vector<1x1xf32>
    %cst_252 = arith.constant 0.000000e+00 : f32
    %760 = vector.broadcast %cst_252 : f32 to vector<1x128xf32>
    %761 = arith.select %754, %180, %760 : vector<1x128xi1>, vector<1x128xf32>
    %cst_253 = arith.constant dense<0.000000e+00> : vector<1xf32>
    %762 = vector.multi_reduction <add>, %761, %cst_253 [1] : vector<1x128xf32> to vector<1xf32>
    %763 = vector.shape_cast %762 : vector<1xf32> to vector<1x1xf32>
    %764 = arith.subf %189, %759 : vector<1x1xf32>
    %765 = arith.mulf %752, %764 : vector<1x1xf32>
    %766 = arith.addf %763, %765 : vector<1x1xf32>
    %cst_254 = arith.constant 0.000000e+00 : f32
    %767 = vector.broadcast %cst_254 : f32 to vector<1x128xf32>
    %768 = arith.select %48, %178, %767 : vector<1x128xi1>, vector<1x128xf32>
    %cst_255 = arith.constant dense<0.000000e+00> : vector<1xf32>
    %769 = vector.multi_reduction <add>, %768, %cst_255 [1] : vector<1x128xf32> to vector<1xf32>
    %770 = vector.shape_cast %769 : vector<1xf32> to vector<1x1xf32>
    %771 = arith.addf %770, %766 : vector<1x1xf32>
    %cst_256 = arith.constant 0.000000e+00 : f32
    %772 = vector.broadcast %cst_256 : f32 to vector<1x5xf32>
    %773 = tpu.concatenate %131, %771, %185, %772 in 1 : vector<1x1xf32>, vector<1x1xf32>, vector<1x1xf32>, vector<1x5xf32> -> vector<1x8xf32>
    %774 = vector.shape_cast %773 : vector<1x8xf32> to vector<1x8x1xf32>
    %775 = vector.shape_cast %774 : vector<1x8x1xf32> to vector<1x8x1xf32>
    %776 = vector.broadcast %775 : vector<1x8x1xf32> to vector<1x8x128xf32>
    %c0_257 = arith.constant 0 : index
    %c0_258 = arith.constant 0 : index
    %c0_259 = arith.constant 0 : index
    %777 = vector.load %arg5[%c0_257, %c0_258, %c0_259] : memref<1x8x128xf32, #tpu.memory_space<vmem>>, vector<1x8x128xf32>
    tpu.vector_store %arg5[%c0_257, %c0_258, %c0_259], %776 {strides = array<i32>} : memref<1x8x128xf32, #tpu.memory_space<vmem>>, vector<1x8x128xf32>,
    return
  }
  func.func @transform_0(%arg0: i32) -> (i32, i32, i32) {
    %c0_i32 = arith.constant 0 : i32
    %c0_i32_0 = arith.constant 0 : i32
    %c0_i32_1 = arith.constant 0 : i32
    return %arg0, %c0_i32, %c0_i32_0 : i32, i32, i32
  }
  func.func @transform_1(%arg0: i32) -> (i32, i32) {
    %c0_i32 = arith.constant 0 : i32
    %c0_i32_0 = arith.constant 0 : i32
    %c0_i32_1 = arith.constant 0 : i32
    return %c0_i32, %c0_i32_0 : i32, i32
  }
  func.func @transform_2(%arg0: i32) -> (i32, i32, i32) {
    %c0_i32 = arith.constant 0 : i32
    %c0_i32_0 = arith.constant 0 : i32
    %c0_i32_1 = arith.constant 0 : i32
    return %arg0, %c0_i32, %c0_i32_0 : i32, i32, i32
  }
  func.func @transform_3(%arg0: i32) -> (i32, i32, i32) {
    %c0_i32 = arith.constant 0 : i32
    %c0_i32_0 = arith.constant 0 : i32
    %c0_i32_1 = arith.constant 0 : i32
    return %arg0, %c0_i32, %c0_i32_0 : i32, i32, i32
  }
  func.func @transform_4(%arg0: i32) -> (i32, i32, i32) {
    %c0_i32 = arith.constant 0 : i32
    %c0_i32_0 = arith.constant 0 : i32
    %c0_i32_1 = arith.constant 0 : i32
    return %arg0, %c0_i32, %c0_i32_0 : i32, i32, i32
  }
}

</mosaic_0001>

<llo_original>
// kernel: tpu_custom_call.1
$region0: #{tpu_custom_call.1}
  #allocation0 [shape = 'u32[]', space=smem, size = 0x4, offset = 0x4, fixed_abs, tag = 'smem constant byte address 0x4 - core index']
  #allocation1 [shape = 'u32[144,128]{1,0:T(1,128)}', space=vmem, size = 0x12000, scoped, tag = 'internal scratch']
  %s0 = inlined_call_operand.vmem [shape: f32[2,5,3], index: 0, kind: input, shape index: {}]
  %s1 = inlined_call_operand.vmem [shape: f32[4,128], index: 1, kind: input, shape index: {}]
  %s2 = inlined_call_operand.vmem [shape: f32[2,4,128], index: 2, kind: input, shape index: {}]
  %s3 = inlined_call_operand.vmem [shape: f32[2,4,128], index: 3, kind: input, shape index: {}]
  %s4 = inlined_call_operand.hbm [shape: f32[2,8,128], index: 4, kind: output, shape index: {}]
  %s5 = sld [smem:[#allocation0]]
  $region56: #{tpu_custom_call.1} parent=0
    _
  %s7 = ssub.s32 1, %s5
  %s8 = scalar_select 0, %s7, %s5
  $region1: #{tpu_custom_call.1} parent=0
    #allocation2 [shape = 'u8[8192]{0}', space=vmem, size = 0x2000, scoped, tag = 'output window, operand 0']
    #allocation3 [shape = 's32[2]{0}', space=sflag, size = 0x8, scoped, tag = 'scoped memory for tpu_custom_call.1']
    %9 = vsyncpa [#allocation3], 0
    %s10 = scalar_lea.sflag [#allocation3], 1
    %11 = vsyncpa %s10, 0
    loop: start=0, step=1, limit=4
    $region2: #{tpu_custom_call.1} parent=1 // loop_pre_header
      _
    $region3: #{tpu_custom_call.1} parent=1 // loop_header
      %s13 = sphi 0, %s17
      %p14 = scmp.ge.s32.totalorder %s13, 4
      %s23 = sphi 0, %s25
      %s26 = sphi 0, %s23
      %s27 = sphi 0, %s26
      %s43 = sphi 0, %s27
      %s47 = sphi 0, %s47
      %s49 = sphi 0, %s47
      %s50 = sphi 0, %s49
      %s64 = sphi 0, %s50
      %s70 = sphi 0, %s72
      %s73 = sphi 0, %s70
      %s74 = sphi 0, %s73
      %s90 = sphi 0, %s74
      %s96 = sphi 0, %s98
      %s99 = sphi 0, %s96
      %s100 = sphi 0, %s99
      %s116 = sphi 0, %s100
      %s122 = sphi 0, %s124
      %s125 = sphi 0, %s122
      %s126 = sphi 0, %s125
      %s142 = sphi 0, %s126
    $region4: #{tpu_custom_call.1} parent=1 // loop_header_branch
      %16 = sbr.rel (%p14) target = $region8
    $region5: #{tpu_custom_call.1} parent=1 // loop_body
      %s18 = ssub.s32 %s13, 1
      %s19 = ssub.s32 %s13, 2
      %s20 = sadd.s32 %s13, 1
      %s21 = ssub.s32 %s13, %s20
      %p22 = scmp.eq.s32.totalorder %s21, 0
      %s24 = sadd.s32 %s23, 1
      %s25 = scalar_select %p22, %s23, %s24
      %p28 = pneg %p22
      %p29 = scmp.eq.s32.totalorder %s13, 1
      %p30 = por %p28, %p29
      %p31 = scmp.ne.s32.totalorder %s23, %s26
      %p32 = scmp.eq.s32.totalorder %s13, 0
      %p33 = por %p31, %p32
      %p34 = scmp.ne.s32.totalorder %s23, %s26
      %p35 = scmp.eq.s32.totalorder %s18, 1
      %p36 = por %p34, %p35
      %p37 = scmp.ne.s32.totalorder %s26, %s27
      %p38 = scmp.eq.s32.totalorder %s18, 0
      %p39 = por %p37, %p38
      %p40 = scmp.ne.s32.totalorder %s26, %s27
      %p41 = scmp.eq.s32.totalorder %s19, 1
      %p42 = por %p40, %p41
      %p44 = scmp.ne.s32.totalorder %s27, %s43
      %p45 = scmp.eq.s32.totalorder %s19, 0
      %p46 = por %p44, %p45
      %s48 = sadd.s32 %s47, 1
      %p51 = scmp.eq.s32.totalorder %s13, 1
      %p52 = scmp.ne.s32.totalorder %s47, %s49
      %p53 = scmp.eq.s32.totalorder %s13, 0
      %p54 = por %p52, %p53
      %p55 = scmp.ne.s32.totalorder %s47, %s49
      %p56 = scmp.eq.s32.totalorder %s18, 1
      %p57 = por %p55, %p56
      %p58 = scmp.ne.s32.totalorder %s49, %s50
      %p59 = scmp.eq.s32.totalorder %s18, 0
      %p60 = por %p58, %p59
      %p61 = scmp.ne.s32.totalorder %s49, %s50
      %p62 = scmp.eq.s32.totalorder %s19, 1
      %p63 = por %p61, %p62
      %p65 = scmp.ne.s32.totalorder %s50, %s64
      %p66 = scmp.eq.s32.totalorder %s19, 0
      %p67 = por %p65, %p66
      %s68 = ssub.s32 %s13, %s20
      %p69 = scmp.eq.s32.totalorder %s68, 0
      %s71 = sadd.s32 %s70, 1
      %s72 = scalar_select %p69, %s70, %s71
      %p75 = pneg %p69
      %p76 = scmp.eq.s32.totalorder %s13, 1
      %p77 = por %p75, %p76
      %p78 = scmp.ne.s32.totalorder %s70, %s73
      %p79 = scmp.eq.s32.totalorder %s13, 0
      %p80 = por %p78, %p79
      %p81 = scmp.ne.s32.totalorder %s70, %s73
      %p82 = scmp.eq.s32.totalorder %s18, 1
      %p83 = por %p81, %p82
      %p84 = scmp.ne.s32.totalorder %s73, %s74
      %p85 = scmp.eq.s32.totalorder %s18, 0
      %p86 = por %p84, %p85
      %p87 = scmp.ne.s32.totalorder %s73, %s74
      %p88 = scmp.eq.s32.totalorder %s19, 1
      %p89 = por %p87, %p88
      %p91 = scmp.ne.s32.totalorder %s74, %s90
      %p92 = scmp.eq.s32.totalorder %s19, 0
      %p93 = por %p91, %p92
      %s94 = ssub.s32 %s13, %s20
      %p95 = scmp.eq.s32.totalorder %s94, 0
      %s97 = sadd.s32 %s96, 1
      %s98 = scalar_select %p95, %s96, %s97
      %p101 = pneg %p95
      %p102 = scmp.eq.s32.totalorder %s13, 1
      %p103 = por %p101, %p102
      %p104 = scmp.ne.s32.totalorder %s96, %s99
      %p105 = scmp.eq.s32.totalorder %s13, 0
      %p106 = por %p104, %p105
      %p107 = scmp.ne.s32.totalorder %s96, %s99
      %p108 = scmp.eq.s32.totalorder %s18, 1
      %p109 = por %p107, %p108
      %p110 = scmp.ne.s32.totalorder %s99, %s100
      %p111 = scmp.eq.s32.totalorder %s18, 0
      %p112 = por %p110, %p111
      %p113 = scmp.ne.s32.totalorder %s99, %s100
      %p114 = scmp.eq.s32.totalorder %s19, 1
      %p115 = por %p113, %p114
      %p117 = scmp.ne.s32.totalorder %s100, %s116
      %p118 = scmp.eq.s32.totalorder %s19, 0
      %p119 = por %p117, %p118
      %s120 = ssub.s32 %s13, %s20
      %p121 = scmp.eq.s32.totalorder %s120, 0
      %s123 = sadd.s32 %s122, 1
      %s124 = scalar_select %p121, %s122, %s123
      %p127 = pneg %p121
      %p128 = scmp.eq.s32.totalorder %s13, 1
      %p129 = por %p127, %p128
      %p130 = scmp.ne.s32.totalorder %s122, %s125
      %p131 = scmp.eq.s32.totalorder %s13, 0
      %p132 = por %p130, %p131
      %p133 = scmp.ne.s32.totalorder %s122, %s125
      %p134 = scmp.eq.s32.totalorder %s18, 1
      %p135 = por %p133, %p134
      %p136 = scmp.ne.s32.totalorder %s125, %s126
      %p137 = scmp.eq.s32.totalorder %s18, 0
      %p138 = por %p136, %p137
      %p139 = scmp.ne.s32.totalorder %s125, %s126
      %p140 = scmp.eq.s32.totalorder %s19, 1
      %p141 = por %p139, %p140
      %p143 = scmp.ne.s32.totalorder %s126, %s142
      %p144 = scmp.eq.s32.totalorder %s19, 0
      %p145 = por %p143, %p144
      %p146 = scmp.le.s32.totalorder 1, %s13
      %p147 = scmp.lt.s32.totalorder %s13, 3
      %p148 = pnand %p146, %p147
      %p149 = pneg %p148
      // Predicated region
      $region9: #{tpu_custom_call.1} parent=5 // pred_check
        _
      $region10: #{tpu_custom_call.1} parent=5 // pred_check_branch
        %151 = sbr.rel (%p148) target = $region12
      $region11: #{tpu_custom_call.1} parent=5 // pred_region
        %s152 = ssub.s32 %s13, 1
        // Predicated region
        $region13: #{tpu_custom_call.1} parent=11 // pred_check
          %p153 = pneg %p60
        $region14: #{tpu_custom_call.1} parent=11 // pred_check_branch
          %155 = sbr.rel (%p153) target = $region16
        $region15: #{tpu_custom_call.1} parent=11 // pred_region
          _
        $region16: #{tpu_custom_call.1} parent=11 // pred_fallthru
          _
      $region12: #{tpu_custom_call.1} parent=5 // pred_fallthru
        _
      %p156 = scmp.lt.s32.totalorder %s13, 2
      // Predicated region
      $region17: #{tpu_custom_call.1} parent=5 // pred_check
        %p157 = pneg %p156
      $region18: #{tpu_custom_call.1} parent=5 // pred_check_branch
        %159 = sbr.rel (%p157) target = $region20
      $region19: #{tpu_custom_call.1} parent=5 // pred_region
        // Predicated region
        $region21: #{tpu_custom_call.1} parent=19 // pred_check
          %p160 = pneg %p33
        $region22: #{tpu_custom_call.1} parent=19 // pred_check_branch
          %162 = sbr.rel (%p160) target = $region24
        $region23: #{tpu_custom_call.1} parent=19 // pred_region
          %p163 = scmp.lt.s32.totalorder %s13, 1
          %s164 = scalar_select %p163, %s13, 1
          %s165 = smul.addr %s164, 8
          %s166 = scalar_lea.vmem %s0, %s165
        $region24: #{tpu_custom_call.1} parent=19 // pred_fallthru
          _
        // Predicated region
        $region25: #{tpu_custom_call.1} parent=19 // pred_check
          %p167 = pneg %p80
        $region26: #{tpu_custom_call.1} parent=19 // pred_check_branch
          %169 = sbr.rel (%p167) target = $region28
        $region27: #{tpu_custom_call.1} parent=19 // pred_region
          %p170 = scmp.lt.s32.totalorder %s13, 1
          %s171 = scalar_select %p170, %s13, 1
          %s172 = smul.addr %s171, 4
          %s173 = scalar_lea.vmem %s2, %s172
        $region28: #{tpu_custom_call.1} parent=19 // pred_fallthru
          _
        // Predicated region
        $region29: #{tpu_custom_call.1} parent=19 // pred_check
          %p174 = pneg %p106
        $region30: #{tpu_custom_call.1} parent=19 // pred_check_branch
          %176 = sbr.rel (%p174) target = $region32
        $region31: #{tpu_custom_call.1} parent=19 // pred_region
          %p177 = scmp.lt.s32.totalorder %s13, 1
          %s178 = scalar_select %p177, %s13, 1
          %s179 = smul.addr %s178, 4
          %s180 = scalar_lea.vmem %s3, %s179
        $region32: #{tpu_custom_call.1} parent=19 // pred_fallthru
          _
      $region20: #{tpu_custom_call.1} parent=5 // pred_fallthru
        _
      %p181 = scmp.le.s32.totalorder 1, %s13
      %p182 = scmp.lt.s32.totalorder %s13, 3
      %p183 = pnand %p181, %p182
      %p184 = pneg %p183
      // Predicated region
      $region33: #{tpu_custom_call.1} parent=5 // pred_check
        _
      $region34: #{tpu_custom_call.1} parent=5 // pred_check_branch
        %186 = sbr.rel (%p183) target = $region36
      $region35: #{tpu_custom_call.1} parent=5 // pred_region
        %s187 = ssub.s32 %s13, 1
        %p188 = scmp.lt.s32.totalorder %s18, 1
        %s189 = scalar_select %p188, %s18, 1
        %s190 = smul.addr %s189, 8
        %s191 = scalar_lea.vmem %s0, %s190
        %p192 = pneg %p39
        %p193 = pneg %p36
        %p194 = pneg %p60
        %p195 = pneg %p57
        %p196 = scmp.lt.s32.totalorder %s18, 1
        %s197 = scalar_select %p196, %s18, 1
        %s198 = smul.addr %s197, 4
        %s199 = scalar_lea.vmem %s2, %s198
        %p200 = pneg %p86
        %p201 = pneg %p83
        %p202 = scmp.lt.s32.totalorder %s18, 1
        %s203 = scalar_select %p202, %s18, 1
        %s204 = smul.addr %s203, 4
        %s205 = scalar_lea.vmem %s3, %s204
        %p206 = pneg %p112
        %p207 = pneg %p109
        %p208 = pneg %p138
        %p209 = pneg %p135
        %s210 = sand.u32 %s125, 1
        %s211 = scalar_lea.sflag [#allocation3], %s210
        %s212 = sand.u32 %s125, 1
        %s213 = smul.addr %s212, 8
        %s214 = scalar_lea.vmem [#allocation2], %s213
        %p215 = scmp.lt.s32.totalorder %s18, 1
        %s216 = scalar_select %p215, %s18, 1
        %s217 = smul.addr %s216, 8
        %s218 = scalar_lea.vmem %s0, %s217
        %p219 = scmp.lt.s32.totalorder %s18, 1
        %s220 = scalar_select %p219, %s18, 1
        %s221 = smul.addr %s220, 4
        %s222 = scalar_lea.vmem %s2, %s221
        %p223 = scmp.lt.s32.totalorder %s18, 1
        %s224 = scalar_select %p223, %s18, 1
        %s225 = smul.addr %s224, 4
        %s226 = scalar_lea.vmem %s3, %s225
        %v227 = vld [vmem:[%s218] sm:$0x1f]
        %v228 = vld [vmem:[%s1] sm:$0xf]
        %v229 = vld [vmem:[%s222] sm:$0xf]
        %v230 = vld [vmem:[%s226] sm:$0xf]
        %v231 = vmul.f32 %v228, 0.5
        %v233 = vrot.slane %v231, 2
        %v235 = vsub.f32 %v228, %v233
        %v236 = vadd.f32 %v228, %v233
        %v238 = vrot.slane %v228, 1
        %v240 = vmul.f32 %v228, %v238
        %v241 = vlaneseq
        %v242 = vand.u32 %v241, 127
        loop: start=0, step=1, limit=3
        $region37: #{tpu_custom_call.1} parent=35 // loop_pre_header
          _
        $region38: #{tpu_custom_call.1} parent=35 // loop_header
          %s244 = sphi 0, %s248
          %p245 = scmp.ge.s32.totalorder %s244, 3
          %v249 = vphi -1.0, %v345
          %v250 = vphi 0.0, %v346
          %v251 = vphi 0.0, %v349
          %v252 = vphi 0.0, %v350
          %v253 = vphi 0.0, %v354
          %v254 = vphi 0.0, %v358
        $region39: #{tpu_custom_call.1} parent=35 // loop_header_branch
          %247 = sbr.rel (%p245) target = $region43
        $region40: #{tpu_custom_call.1} parent=35 // loop_body
          %v255 = vstv %s244
          %vm256 = vcmp.eq.s32.totalorder %v242, %v255
          %v257 = vsel %vm256, %v227, 0.0
          %vm258 = vcmask 16384
          %v259 = vsel %vm258, %v257, 0.0
          %260 = vadd.xlane.f32.xlu0 %v259
          %v261 = vpop.xlane.xlu0 %260
          %vm262 = vcmask 17409
          %v263 = vsel %vm262, %v257, 0.0
          %264 = vadd.xlane.f32.xlu0 %v263
          %v265 = vpop.xlane.xlu0 %264
          %vm266 = vcmask 18434
          %v267 = vsel %vm266, %v257, 0.0
          %268 = vadd.xlane.f32.xlu0 %v267
          %v269 = vpop.xlane.xlu0 %268
          %vm270 = vcmask 19459
          %v271 = vsel %vm270, %v257, 0.0
          %272 = vadd.xlane.f32.xlu0 %v271
          %v273 = vpop.xlane.xlu0 %272
          %vm274 = vcmask 20484
          %v275 = vsel %vm274, %v257, 0.0
          %276 = vadd.xlane.f32.xlu0 %v275
          %v277 = vpop.xlane.xlu0 %276
          %v279 = vrot.slane %v236, 6
          %v281 = vmin.f32 %v269, %v279
          %v282 = vmax.f32 %v261, %v235
          %v284 = vrot.slane %v282, 6
          %v286 = vsub.f32 %v281, %v284
          %v287 = vmax.f32 %v286, 0.0
          %v288 = vmin.f32 %v273, %v279
          %v289 = vmax.f32 %v265, %v235
          %v291 = vrot.slane %v289, 6
          %v293 = vsub.f32 %v288, %v291
          %v294 = vmax.f32 %v293, 0.0
          %v296 = vrot.slane %v294, 1
          %v298 = vmul.f32 %v287, %v296
          %v300 = vrot.slane %v261, 6
          %v302 = vsub.f32 %v269, %v300
          %v304 = vrot.slane %v265, 6
          %v306 = vsub.f32 %v273, %v304
          %v308 = vrot.slane %v306, 1
          %v310 = vmul.f32 %v302, %v308
          %312 = vset.pattern.permute.xlu0 0
          %313 = vperm.xlu0 %312, %v310
          %v314 = vpop.permute.xlu0 %313
          %v316 = vadd.f32 %v314, %v240
          %v317 = vsub.f32 %v316, %v298
          %v318 = vrcp.pop %v317
          %v319 = vmul.f32 %v298, %v318
          %vm320 = vcmask 1042434
          %v321 = vsel %vm320, %v319, -inf
          %322 = vmax.xlane.f32.xlu0 %v321
          %v323 = vpop.xlane.xlu0 %322
          %vm324 = vcmp.eq.f32.partialorder %v319, %v323
          %v325 = vsel %vm324, %v242, 128
          %v326 = vsel %vm320, %v325, 2147483647
          %v327 = vand.u32 %v326, 65535
          %v328 = vshra.s32 %v326, 16
          %v329 = vcvt.s32.f32 %v327
          %v330 = vcvt.s32.f32 %v328
          %331 = vmin.xlane.f32.xlu0 %v330
          %v332 = vpop.xlane.xlu0 %331
          %vm333 = vcmp.eq.f32.partialorder %v330, %v332
          %v334 = vsel %vm333, %v329, inf
          %335 = vmin.xlane.f32.xlu0 %v334
          %v336 = vpop.xlane.xlu0 %335
          %v337 = vcvt.f32.s32 %v336
          %v338 = vcvt.f32.s32 %v332
          %v339 = vshll.u32 %v338, 16
          %v340 = vadd.s32 %v339, %v337
          %vm341 = vcmp.eq.s32.totalorder %v242, %v340
          %vm342 = vcmp.gt.f32.partialorder %v319, %v249
          %vm343 = vmor %vm342, %vm341
          %v344 = vsel %vm342, %v319, %v249
          %v345 = vsel %vm341, 2.0, %v344
          %v346 = vsel %vm343, %v300, %v250
          %v347 = vrot.slane %v265, 7
          %v349 = vsel %vm343, %v347, %v251
          %v350 = vsel %vm343, %v269, %v252
          %v352 = vrot.slane %v273, 1
          %v354 = vsel %vm343, %v352, %v253
          %v356 = vrot.slane %v277, 2
          %v358 = vsel %vm343, %v356, %v254
        $region41: #{tpu_custom_call.1} parent=35 // loop_footer
          %s248 = sadd.s32 1, %s244
        $region42: #{tpu_custom_call.1} parent=35 // loop_footer_branch
          %243 = sbr.rel target = $region38
        $region43: #{tpu_custom_call.1} parent=35 // loop_exit
          _
        %vm359 = vcmp.lt.f32.partialorder %v249, 0.5
        %v360 = vadd.f32 %v254, 1.0
        %v361 = vsel %vm359, 0.0, %v360
        %vm362 = vcmp.gt.f32.partialorder %v361, 0.0
        %v363 = vadd.f32 %v250, %v252
        %v364 = vmul.f32 %v363, 0.5
        %v365 = vrot.slane %v228, 6
        %v367 = vsub.f32 %v364, %v365
        %v368 = vmul.f32 %v228, 0.1
        %v369 = vrcp.pop %v368
        %v370 = vmul.f32 %v367, %v369
        %v371 = vadd.f32 %v251, %v253
        %v372 = vmul.f32 %v371, 0.5
        %v373 = vrot.slane %v228, 7
        %v375 = vsub.f32 %v372, %v373
        %v377 = vrot.slane %v368, 1
        %v379 = vrcp.pop %v377
        %v380 = vmul.f32 %v375, %v379
        %v381 = vsub.f32 %v252, %v250
        %v382 = vmax.f32 %v381, 1e-12
        %v383 = vrcp.pop %v228
        %v384 = vmul.f32 %v382, %v383
        %v385 = vlog2.pop %v384
        %v386 = vmul.f32 %v385, 0.6931472
        %v387 = vrcp.pop 0.2
        %v388 = vmul.f32 %v386, %v387
        %v389 = vsub.f32 %v253, %v251
        %v390 = vmax.f32 %v389, 1e-12
        %v391 = vrcp.pop %v238
        %v392 = vmul.f32 %v390, %v391
        %v393 = vlog2.pop %v392
        %v394 = vmul.f32 %v393, 0.6931472
        %v395 = vmul.f32 %v394, %v387
        %v397 = vrot.slane %v370, 2
        %v399 = vsub.f32 %v229, %v397
        %v400 = vand.u32 2147483647, %v399
        %vm401 = vcmp.lt.f32.partialorder %v400, 1.0
        %v402 = vmul.f32 %v399, 0.5
        %v403 = vmul.f32 %v402, %v399
        %v404 = vsub.f32 %v400, 0.5
        %v405 = vsel %vm401, %v403, %v404
        %v407 = vrot.slane %v380, 1
        %v409 = vsub.f32 %v229, %v407
        %v410 = vand.u32 2147483647, %v409
        %vm411 = vcmp.lt.f32.partialorder %v410, 1.0
        %v412 = vmul.f32 %v409, 0.5
        %v413 = vmul.f32 %v412, %v409
        %v414 = vsub.f32 %v410, 0.5
        %v415 = vsel %vm411, %v413, %v414
        %v417 = vrot.slane %v415, 1
        %v419 = vadd.f32 %v405, %v417
        %v420 = vsub.f32 %v229, %v388
        %v421 = vand.u32 2147483647, %v420
        %vm422 = vcmp.lt.f32.partialorder %v421, 1.0
        %v423 = vmul.f32 %v420, 0.5
        %v424 = vmul.f32 %v423, %v420
        %v425 = vsub.f32 %v421, 0.5
        %v426 = vsel %vm422, %v424, %v425
        %v428 = vrot.slane %v426, 2
        %v430 = vadd.f32 %v419, %v428
        %v432 = vrot.slane %v395, 7
        %v434 = vsub.f32 %v229, %v432
        %v435 = vand.u32 2147483647, %v434
        %vm436 = vcmp.lt.f32.partialorder %v435, 1.0
        %v437 = vmul.f32 %v434, 0.5
        %v438 = vmul.f32 %v437, %v434
        %v439 = vsub.f32 %v435, 0.5
        %v440 = vsel %vm436, %v438, %v439
        %v442 = vrot.slane %v440, 3
        %v444 = vadd.f32 %v430, %v442
        %v446 = vrot.slane %v444, 6
        %v448 = vsel %vm362, %v446, 0.0
        %vm449 = vcmask 1042434
        %v450 = vsel %vm449, %v448, 0.0
        %451 = vadd.xlane.f32.xlu0 %v450
        %v452 = vpop.xlane.xlu0 %451
        %v453 = vcvt.f32.s32.to.zero.pseudo %v361
        %vm454 = vcmp.eq.s32.totalorder %v453, 0
        %v456 = vrot.slane %v230, 6
        %v458 = vsel %vm454, %v456, 0.0
        %v459 = vrot.slane %v230, 1
        %v461 = vmax.f32 %v230, %v459
        %v462 = vsub.f32 %v230, %v461
        %v463 = vmul.f32 %v462, 1.442695
        %v464 = vpow.pop %v463
        %v466 = vrot.slane %v461, 7
        %v468 = vsub.f32 %v230, %v466
        %v469 = vmul.f32 %v468, 1.442695
        %v470 = vpow.pop %v469
        %v472 = vrot.slane %v470, 1
        %v474 = vadd.f32 %v464, %v472
        %vm475 = vcmp.eq.s32.totalorder %v453, 1
        %v476 = vrot.slane %v230, 7
        %v478 = vsel %vm475, %v476, %v458
        %v479 = vrot.slane %v230, 2
        %v481 = vmax.f32 %v461, %v479
        %v482 = vsub.f32 %v461, %v481
        %v483 = vmul.f32 %v482, 1.442695
        %v484 = vpow.pop %v483
        %v485 = vmul.f32 %v474, %v484
        %v487 = vrot.slane %v481, 6
        %v489 = vsub.f32 %v230, %v487
        %v490 = vmul.f32 %v489, 1.442695
        %v491 = vpow.pop %v490
        %v493 = vrot.slane %v491, 2
        %v495 = vadd.f32 %v485, %v493
        %vm496 = vcmp.eq.s32.totalorder %v453, 2
        %v497 = vsel %vm496, %v230, %v478
        %v498 = vrot.slane %v230, 3
        %v500 = vmax.f32 %v481, %v498
        %v501 = vsub.f32 %v481, %v500
        %v502 = vmul.f32 %v501, 1.442695
        %v503 = vpow.pop %v502
        %v504 = vmul.f32 %v495, %v503
        %v506 = vrot.slane %v500, 5
        %v508 = vsub.f32 %v230, %v506
        %v509 = vmul.f32 %v508, 1.442695
        %v510 = vpow.pop %v509
        %v512 = vrot.slane %v510, 3
        %v514 = vadd.f32 %v504, %v512
        %vm515 = vcmp.eq.s32.totalorder %v453, 3
        %v516 = vsel %vm515, %v459, %v497
        %v517 = vlog2.pop %v514
        %v518 = vmul.f32 %v517, 0.6931472
        %v519 = vadd.f32 %v500, %v518
        %v521 = vrot.slane %v516, 2
        %v523 = vsub.f32 %v519, %v521
        %v525 = vrot.slane %v523, 6
        %v527 = vsel %vm362, 0.0, %v525
        %v528 = vsel %vm362, 1.0, 0.0
        %v529 = vsel %vm449, %v528, 0.0
        %530 = vadd.xlane.f32.xlu0 %v529
        %v531 = vpop.xlane.xlu0 %530
        %v532 = vmul.f32 %v531, 3.0
        %v533 = vmin.f32 %v532, 127.0
        %v535 = vsel %vm449, %v527, 2147483648
        %v536 = vand.u32 %v535, 65535
        %v537 = vshra.s32 %v535, 16
        %v538 = vcvt.s32.f32 %v536
        %v539 = vcvt.s32.f32 %v537
        %540 = vmax.xlane.f32.xlu0 %v539
        %v541 = vpop.xlane.xlu0 %540
        %vm542 = vcmp.eq.f32.partialorder %v539, %v541
        %v543 = vsel %vm542, %v538, -inf
        %544 = vmax.xlane.f32.xlu0 %v543
        %v545 = vpop.xlane.xlu0 %544
        %v546 = vcvt.f32.s32 %v545
        %v547 = vcvt.f32.s32 %v541
        %v548 = vshll.u32 %v547, 16
        %v549 = vadd.s32 %v548, %v546
        %v550 = vadd.s32 %v549, 1
        %v551 = vshra.s32 %v550, 1
        %vm552 = vcmp.ge.s32.totalorder %v527, %v551
        %v553 = vsel %vm552, 1.0, 0.0
        %v554 = vsel %vm449, %v553, 0.0
        %555 = vadd.xlane.f32.xlu0 %v554
        %v556 = vpop.xlane.xlu0 %555
        %vm557 = vcmp.ge.f32.partialorder %v556, %v533
        %v558 = vsel %vm557, %v551, 0
        %v559 = vsub.s32 %v551, 1
        %v560 = vsel %vm557, %v549, %v559
        %v561 = vsub.s32 %v560, %v558
        %v562 = vadd.s32 %v561, 1
        %v563 = vshra.s32 %v562, 1
        %v564 = vadd.s32 %v558, %v563
        %vm565 = vcmp.ge.s32.totalorder %v527, %v564
        %v566 = vsel %vm565, 1.0, 0.0
        %v567 = vsel %vm449, %v566, 0.0
        %568 = vadd.xlane.f32.xlu0 %v567
        %v569 = vpop.xlane.xlu0 %568
        %vm570 = vcmp.ge.f32.partialorder %v569, %v533
        %v571 = vsel %vm570, %v564, %v558
        %v572 = vsub.s32 %v564, 1
        %v573 = vsel %vm570, %v560, %v572
        %v574 = vsub.s32 %v573, %v571
        %v575 = vadd.s32 %v574, 1
        %v576 = vshra.s32 %v575, 1
        %v577 = vadd.s32 %v571, %v576
        %vm578 = vcmp.ge.s32.totalorder %v527, %v577
        %v579 = vsel %vm578, 1.0, 0.0
        %v580 = vsel %vm449, %v579, 0.0
        %581 = vadd.xlane.f32.xlu0 %v580
        %v582 = vpop.xlane.xlu0 %581
        %vm583 = vcmp.ge.f32.partialorder %v582, %v533
        %v584 = vsel %vm583, %v577, %v571
        %v585 = vsub.s32 %v577, 1
        %v586 = vsel %vm583, %v573, %v585
        %v587 = vsub.s32 %v586, %v584
        %v588 = vadd.s32 %v587, 1
        %v589 = vshra.s32 %v588, 1
        %v590 = vadd.s32 %v584, %v589
        %vm591 = vcmp.ge.s32.totalorder %v527, %v590
        %v592 = vsel %vm591, 1.0, 0.0
        %v593 = vsel %vm449, %v592, 0.0
        %594 = vadd.xlane.f32.xlu0 %v593
        %v595 = vpop.xlane.xlu0 %594
        %vm596 = vcmp.ge.f32.partialorder %v595, %v533
        %v597 = vsel %vm596, %v590, %v584
        %v598 = vsub.s32 %v590, 1
        %v599 = vsel %vm596, %v586, %v598
        %v600 = vsub.s32 %v599, %v597
        %v601 = vadd.s32 %v600, 1
        %v602 = vshra.s32 %v601, 1
        %v603 = vadd.s32 %v597, %v602
        %vm604 = vcmp.ge.s32.totalorder %v527, %v603
        %v605 = vsel %vm604, 1.0, 0.0
        %v606 = vsel %vm449, %v605, 0.0
        %607 = vadd.xlane.f32.xlu0 %v606
        %v608 = vpop.xlane.xlu0 %607
        %vm609 = vcmp.ge.f32.partialorder %v608, %v533
        %v610 = vsel %vm609, %v603, %v597
        %v611 = vsub.s32 %v603, 1
        %v612 = vsel %vm609, %v599, %v611
        %v613 = vsub.s32 %v612, %v610
        %v614 = vadd.s32 %v613, 1
        %v615 = vshra.s32 %v614, 1
        %v616 = vadd.s32 %v610, %v615
        %vm617 = vcmp.ge.s32.totalorder %v527, %v616
        %v618 = vsel %vm617, 1.0, 0.0
        %v619 = vsel %vm449, %v618, 0.0
        %620 = vadd.xlane.f32.xlu0 %v619
        %v621 = vpop.xlane.xlu0 %620
        %vm622 = vcmp.ge.f32.partialorder %v621, %v533
        %v623 = vsel %vm622, %v616, %v610
        %v624 = vsub.s32 %v616, 1
        %v625 = vsel %vm622, %v612, %v624
        %v626 = vsub.s32 %v625, %v623
        %v627 = vadd.s32 %v626, 1
        %v628 = vshra.s32 %v627, 1
        %v629 = vadd.s32 %v623, %v628
        %vm630 = vcmp.ge.s32.totalorder %v527, %v629
        %v631 = vsel %vm630, 1.0, 0.0
        %v632 = vsel %vm449, %v631, 0.0
        %633 = vadd.xlane.f32.xlu0 %v632
        %v634 = vpop.xlane.xlu0 %633
        %vm635 = vcmp.ge.f32.partialorder %v634, %v533
        %v636 = vsel %vm635, %v629, %v623
        %v637 = vsub.s32 %v629, 1
        %v638 = vsel %vm635, %v625, %v637
        %v639 = vsub.s32 %v638, %v636
        %v640 = vadd.s32 %v639, 1
        %v641 = vshra.s32 %v640, 1
        %v642 = vadd.s32 %v636, %v641
        %vm643 = vcmp.ge.s32.totalorder %v527, %v642
        %v644 = vsel %vm643, 1.0, 0.0
        %v645 = vsel %vm449, %v644, 0.0
        %646 = vadd.xlane.f32.xlu0 %v645
        %v647 = vpop.xlane.xlu0 %646
        %vm648 = vcmp.ge.f32.partialorder %v647, %v533
        %v649 = vsel %vm648, %v642, %v636
        %v650 = vsub.s32 %v642, 1
        %v651 = vsel %vm648, %v638, %v650
        %v652 = vsub.s32 %v651, %v649
        %v653 = vadd.s32 %v652, 1
        %v654 = vshra.s32 %v653, 1
        %v655 = vadd.s32 %v649, %v654
        %vm656 = vcmp.ge.s32.totalorder %v527, %v655
        %v657 = vsel %vm656, 1.0, 0.0
        %v658 = vsel %vm449, %v657, 0.0
        %659 = vadd.xlane.f32.xlu0 %v658
        %v660 = vpop.xlane.xlu0 %659
        %vm661 = vcmp.ge.f32.partialorder %v660, %v533
        %v662 = vsel %vm661, %v655, %v649
        %v663 = vsub.s32 %v655, 1
        %v664 = vsel %vm661, %v651, %v663
        %v665 = vsub.s32 %v664, %v662
        %v666 = vadd.s32 %v665, 1
        %v667 = vshra.s32 %v666, 1
        %v668 = vadd.s32 %v662, %v667
        %vm669 = vcmp.ge.s32.totalorder %v527, %v668
        %v670 = vsel %vm669, 1.0, 0.0
        %v671 = vsel %vm449, %v670, 0.0
        %672 = vadd.xlane.f32.xlu0 %v671
        %v673 = vpop.xlane.xlu0 %672
        %vm674 = vcmp.ge.f32.partialorder %v673, %v533
        %v675 = vsel %vm674, %v668, %v662
        %v676 = vsub.s32 %v668, 1
        %v677 = vsel %vm674, %v664, %v676
        %v678 = vsub.s32 %v677, %v675
        %v679 = vadd.s32 %v678, 1
        %v680 = vshra.s32 %v679, 1
        %v681 = vadd.s32 %v675, %v680
        %vm682 = vcmp.ge.s32.totalorder %v527, %v681
        %v683 = vsel %vm682, 1.0, 0.0
        %v684 = vsel %vm449, %v683, 0.0
        %685 = vadd.xlane.f32.xlu0 %v684
        %v686 = vpop.xlane.xlu0 %685
        %vm687 = vcmp.ge.f32.partialorder %v686, %v533
        %v688 = vsel %vm687, %v681, %v675
        %v689 = vsub.s32 %v681, 1
        %v690 = vsel %vm687, %v677, %v689
        %v691 = vsub.s32 %v690, %v688
        %v692 = vadd.s32 %v691, 1
        %v693 = vshra.s32 %v692, 1
        %v694 = vadd.s32 %v688, %v693
        %vm695 = vcmp.ge.s32.totalorder %v527, %v694
        %v696 = vsel %vm695, 1.0, 0.0
        %v697 = vsel %vm449, %v696, 0.0
        %698 = vadd.xlane.f32.xlu0 %v697
        %v699 = vpop.xlane.xlu0 %698
        %vm700 = vcmp.ge.f32.partialorder %v699, %v533
        %v701 = vsel %vm700, %v694, %v688
        %v702 = vsub.s32 %v694, 1
        %v703 = vsel %vm700, %v690, %v702
        %v704 = vsub.s32 %v703, %v701
        %v705 = vadd.s32 %v704, 1
        %v706 = vshra.s32 %v705, 1
        %v707 = vadd.s32 %v701, %v706
        %vm708 = vcmp.ge.s32.totalorder %v527, %v707
        %v709 = vsel %vm708, 1.0, 0.0
        %v710 = vsel %vm449, %v709, 0.0
        %711 = vadd.xlane.f32.xlu0 %v710
        %v712 = vpop.xlane.xlu0 %711
        %vm713 = vcmp.ge.f32.partialorder %v712, %v533
        %v714 = vsel %vm713, %v707, %v701
        %v715 = vsub.s32 %v707, 1
        %v716 = vsel %vm713, %v703, %v715
        %v717 = vsub.s32 %v716, %v714
        %v718 = vadd.s32 %v717, 1
        %v719 = vshra.s32 %v718, 1
        %v720 = vadd.s32 %v714, %v719
        %vm721 = vcmp.ge.s32.totalorder %v527, %v720
        %v722 = vsel %vm721, 1.0, 0.0
        %v723 = vsel %vm449, %v722, 0.0
        %724 = vadd.xlane.f32.xlu0 %v723
        %v725 = vpop.xlane.xlu0 %724
        %vm726 = vcmp.ge.f32.partialorder %v725, %v533
        %v727 = vsel %vm726, %v720, %v714
        %v728 = vsub.s32 %v720, 1
        %v729 = vsel %vm726, %v716, %v728
        %v730 = vsub.s32 %v729, %v727
        %v731 = vadd.s32 %v730, 1
        %v732 = vshra.s32 %v731, 1
        %v733 = vadd.s32 %v727, %v732
        %vm734 = vcmp.ge.s32.totalorder %v527, %v733
        %v735 = vsel %vm734, 1.0, 0.0
        %v736 = vsel %vm449, %v735, 0.0
        %737 = vadd.xlane.f32.xlu0 %v736
        %v738 = vpop.xlane.xlu0 %737
        %vm739 = vcmp.ge.f32.partialorder %v738, %v533
        %v740 = vsel %vm739, %v733, %v727
        %v741 = vsub.s32 %v733, 1
        %v742 = vsel %vm739, %v729, %v741
        %v743 = vsub.s32 %v742, %v740
        %v744 = vadd.s32 %v743, 1
        %v745 = vshra.s32 %v744, 1
        %v746 = vadd.s32 %v740, %v745
        %vm747 = vcmp.ge.s32.totalorder %v527, %v746
        %v748 = vsel %vm747, 1.0, 0.0
        %v749 = vsel %vm449, %v748, 0.0
        %750 = vadd.xlane.f32.xlu0 %v749
        %v751 = vpop.xlane.xlu0 %750
        %vm752 = vcmp.ge.f32.partialorder %v751, %v533
        %v753 = vsel %vm752, %v746, %v740
        %v754 = vsub.s32 %v746, 1
        %v755 = vsel %vm752, %v742, %v754
        %v756 = vsub.s32 %v755, %v753
        %v757 = vadd.s32 %v756, 1
        %v758 = vshra.s32 %v757, 1
        %v759 = vadd.s32 %v753, %v758
        %vm760 = vcmp.ge.s32.totalorder %v527, %v759
        %v761 = vsel %vm760, 1.0, 0.0
        %v762 = vsel %vm449, %v761, 0.0
        %763 = vadd.xlane.f32.xlu0 %v762
        %v764 = vpop.xlane.xlu0 %763
        %vm765 = vcmp.ge.f32.partialorder %v764, %v533
        %v766 = vsel %vm765, %v759, %v753
        %v767 = vsub.s32 %v759, 1
        %v768 = vsel %vm765, %v755, %v767
        %v769 = vsub.s32 %v768, %v766
        %v770 = vadd.s32 %v769, 1
        %v771 = vshra.s32 %v770, 1
        %v772 = vadd.s32 %v766, %v771
        %vm773 = vcmp.ge.s32.totalorder %v527, %v772
        %v774 = vsel %vm773, 1.0, 0.0
        %v775 = vsel %vm449, %v774, 0.0
        %776 = vadd.xlane.f32.xlu0 %v775
        %v777 = vpop.xlane.xlu0 %776
        %vm778 = vcmp.ge.f32.partialorder %v777, %v533
        %v779 = vsel %vm778, %v772, %v766
        %v780 = vsub.s32 %v772, 1
        %v781 = vsel %vm778, %v768, %v780
        %v782 = vsub.s32 %v781, %v779
        %v783 = vadd.s32 %v782, 1
        %v784 = vshra.s32 %v783, 1
        %v785 = vadd.s32 %v779, %v784
        %vm786 = vcmp.ge.s32.totalorder %v527, %v785
        %v787 = vsel %vm786, 1.0, 0.0
        %v788 = vsel %vm449, %v787, 0.0
        %789 = vadd.xlane.f32.xlu0 %v788
        %v790 = vpop.xlane.xlu0 %789
        %vm791 = vcmp.ge.f32.partialorder %v790, %v533
        %v792 = vsel %vm791, %v785, %v779
        %v793 = vsub.s32 %v785, 1
        %v794 = vsel %vm791, %v781, %v793
        %v795 = vsub.s32 %v794, %v792
        %v796 = vadd.s32 %v795, 1
        %v797 = vshra.s32 %v796, 1
        %v798 = vadd.s32 %v792, %v797
        %vm799 = vcmp.ge.s32.totalorder %v527, %v798
        %v800 = vsel %vm799, 1.0, 0.0
        %v801 = vsel %vm449, %v800, 0.0
        %802 = vadd.xlane.f32.xlu0 %v801
        %v803 = vpop.xlane.xlu0 %802
        %vm804 = vcmp.ge.f32.partialorder %v803, %v533
        %v805 = vsel %vm804, %v798, %v792
        %v806 = vsub.s32 %v798, 1
        %v807 = vsel %vm804, %v794, %v806
        %v808 = vsub.s32 %v807, %v805
        %v809 = vadd.s32 %v808, 1
        %v810 = vshra.s32 %v809, 1
        %v811 = vadd.s32 %v805, %v810
        %vm812 = vcmp.ge.s32.totalorder %v527, %v811
        %v813 = vsel %vm812, 1.0, 0.0
        %v814 = vsel %vm449, %v813, 0.0
        %815 = vadd.xlane.f32.xlu0 %v814
        %v816 = vpop.xlane.xlu0 %815
        %vm817 = vcmp.ge.f32.partialorder %v816, %v533
        %v818 = vsel %vm817, %v811, %v805
        %v819 = vsub.s32 %v811, 1
        %v820 = vsel %vm817, %v807, %v819
        %v821 = vsub.s32 %v820, %v818
        %v822 = vadd.s32 %v821, 1
        %v823 = vshra.s32 %v822, 1
        %v824 = vadd.s32 %v818, %v823
        %vm825 = vcmp.ge.s32.totalorder %v527, %v824
        %v826 = vsel %vm825, 1.0, 0.0
        %v827 = vsel %vm449, %v826, 0.0
        %828 = vadd.xlane.f32.xlu0 %v827
        %v829 = vpop.xlane.xlu0 %828
        %vm830 = vcmp.ge.f32.partialorder %v829, %v533
        %v831 = vsel %vm830, %v824, %v818
        %v832 = vsub.s32 %v824, 1
        %v833 = vsel %vm830, %v820, %v832
        %v834 = vsub.s32 %v833, %v831
        %v835 = vadd.s32 %v834, 1
        %v836 = vshra.s32 %v835, 1
        %v837 = vadd.s32 %v831, %v836
        %vm838 = vcmp.ge.s32.totalorder %v527, %v837
        %v839 = vsel %vm838, 1.0, 0.0
        %v840 = vsel %vm449, %v839, 0.0
        %841 = vadd.xlane.f32.xlu0 %v840
        %v842 = vpop.xlane.xlu0 %841
        %vm843 = vcmp.ge.f32.partialorder %v842, %v533
        %v844 = vsel %vm843, %v837, %v831
        %v845 = vsub.s32 %v837, 1
        %v846 = vsel %vm843, %v833, %v845
        %v847 = vsub.s32 %v846, %v844
        %v848 = vadd.s32 %v847, 1
        %v849 = vshra.s32 %v848, 1
        %v850 = vadd.s32 %v844, %v849
        %vm851 = vcmp.ge.s32.totalorder %v527, %v850
        %v852 = vsel %vm851, 1.0, 0.0
        %v853 = vsel %vm449, %v852, 0.0
        %854 = vadd.xlane.f32.xlu0 %v853
        %v855 = vpop.xlane.xlu0 %854
        %vm856 = vcmp.ge.f32.partialorder %v855, %v533
        %v857 = vsel %vm856, %v850, %v844
        %v858 = vsub.s32 %v850, 1
        %v859 = vsel %vm856, %v846, %v858
        %v860 = vsub.s32 %v859, %v857
        %v861 = vadd.s32 %v860, 1
        %v862 = vshra.s32 %v861, 1
        %v863 = vadd.s32 %v857, %v862
        %vm864 = vcmp.ge.s32.totalorder %v527, %v863
        %v865 = vsel %vm864, 1.0, 0.0
        %v866 = vsel %vm449, %v865, 0.0
        %867 = vadd.xlane.f32.xlu0 %v866
        %v868 = vpop.xlane.xlu0 %867
        %vm869 = vcmp.ge.f32.partialorder %v868, %v533
        %v870 = vsel %vm869, %v863, %v857
        %v871 = vsub.s32 %v863, 1
        %v872 = vsel %vm869, %v859, %v871
        %v873 = vsub.s32 %v872, %v870
        %v874 = vadd.s32 %v873, 1
        %v875 = vshra.s32 %v874, 1
        %v876 = vadd.s32 %v870, %v875
        %vm877 = vcmp.ge.s32.totalorder %v527, %v876
        %v878 = vsel %vm877, 1.0, 0.0
        %v879 = vsel %vm449, %v878, 0.0
        %880 = vadd.xlane.f32.xlu0 %v879
        %v881 = vpop.xlane.xlu0 %880
        %vm882 = vcmp.ge.f32.partialorder %v881, %v533
        %v883 = vsel %vm882, %v876, %v870
        %v884 = vsub.s32 %v876, 1
        %v885 = vsel %vm882, %v872, %v884
        %v886 = vsub.s32 %v885, %v883
        %v887 = vadd.s32 %v886, 1
        %v888 = vshra.s32 %v887, 1
        %v889 = vadd.s32 %v883, %v888
        %vm890 = vcmp.ge.s32.totalorder %v527, %v889
        %v891 = vsel %vm890, 1.0, 0.0
        %v892 = vsel %vm449, %v891, 0.0
        %893 = vadd.xlane.f32.xlu0 %v892
        %v894 = vpop.xlane.xlu0 %893
        %vm895 = vcmp.ge.f32.partialorder %v894, %v533
        %v896 = vsel %vm895, %v889, %v883
        %v897 = vsub.s32 %v889, 1
        %v898 = vsel %vm895, %v885, %v897
        %v899 = vsub.s32 %v898, %v896
        %v900 = vadd.s32 %v899, 1
        %v901 = vshra.s32 %v900, 1
        %v902 = vadd.s32 %v896, %v901
        %vm903 = vcmp.ge.s32.totalorder %v527, %v902
        %v904 = vsel %vm903, 1.0, 0.0
        %v905 = vsel %vm449, %v904, 0.0
        %906 = vadd.xlane.f32.xlu0 %v905
        %v907 = vpop.xlane.xlu0 %906
        %vm908 = vcmp.ge.f32.partialorder %v907, %v533
        %v909 = vsel %vm908, %v902, %v896
        %v910 = vsub.s32 %v902, 1
        %v911 = vsel %vm908, %v898, %v910
        %v912 = vsub.s32 %v911, %v909
        %v913 = vadd.s32 %v912, 1
        %v914 = vshra.s32 %v913, 1
        %v915 = vadd.s32 %v909, %v914
        %vm916 = vcmp.ge.s32.totalorder %v527, %v915
        %v917 = vsel %vm916, 1.0, 0.0
        %v918 = vsel %vm449, %v917, 0.0
        %919 = vadd.xlane.f32.xlu0 %v918
        %v920 = vpop.xlane.xlu0 %919
        %vm921 = vcmp.ge.f32.partialorder %v920, %v533
        %v922 = vsel %vm921, %v915, %v909
        %v923 = vsub.s32 %v915, 1
        %v924 = vsel %vm921, %v911, %v923
        %v925 = vsub.s32 %v924, %v922
        %v926 = vadd.s32 %v925, 1
        %v927 = vshra.s32 %v926, 1
        %v928 = vadd.s32 %v922, %v927
        %vm929 = vcmp.ge.s32.totalorder %v527, %v928
        %v930 = vsel %vm929, 1.0, 0.0
        %v931 = vsel %vm449, %v930, 0.0
        %932 = vadd.xlane.f32.xlu0 %v931
        %v933 = vpop.xlane.xlu0 %932
        %vm934 = vcmp.ge.f32.partialorder %v933, %v533
        %v935 = vsel %vm934, %v928, %v922
        %v936 = vsub.s32 %v928, 1
        %v937 = vsel %vm934, %v924, %v936
        %v938 = vsub.s32 %v937, %v935
        %v939 = vadd.s32 %v938, 1
        %v940 = vshra.s32 %v939, 1
        %v941 = vadd.s32 %v935, %v940
        %vm942 = vcmp.ge.s32.totalorder %v527, %v941
        %v943 = vsel %vm942, 1.0, 0.0
        %v944 = vsel %vm449, %v943, 0.0
        %945 = vadd.xlane.f32.xlu0 %v944
        %v946 = vpop.xlane.xlu0 %945
        %vm947 = vcmp.ge.f32.partialorder %v946, %v533
        %v948 = vsel %vm947, %v941, %v935
        %vm950 = vcmp.gt.f32.partialorder %v527, %v948
        %v951 = vsel %vm950, 1.0, 0.0
        %v952 = vsel %vm449, %v951, 0.0
        %953 = vadd.xlane.f32.xlu0 %v952
        %v954 = vpop.xlane.xlu0 %953
        %v955 = vsel %vm950, %v527, 0.0
        %v956 = vsel %vm449, %v955, 0.0
        %957 = vadd.xlane.f32.xlu0 %v956
        %v958 = vpop.xlane.xlu0 %957
        %v959 = vsub.f32 %v533, %v954
        %v960 = vmul.f32 %v948, %v959
        %v961 = vadd.f32 %v958, %v960
        %v962 = vsel %vm362, %v525, 0.0
        %v963 = vsel %vm449, %v962, 0.0
        %964 = vadd.xlane.f32.xlu0 %v963
        %v965 = vpop.xlane.xlu0 %964
        %v966 = vadd.f32 %v965, %v961
        %vm967 = vcmask 7168
        %v968 = vsel %vm967, %v452, %v966
        %vm969 = vcmask 15360
        %v970 = vsel %vm969, %v968, %v531
        %vm971 = vcmask 23552
        %v972 = vsel %vm971, %v970, 0.0
        %v973 = vlaneseq
        %v974 = vshrl.u32 %v973, 7
        %v975 = vsub.s32 2, %v974
        %v976 = vrot.slane %v972, %v975
        %978 = vbcast.lane.b32.xlu0 %v976, 256
        %v979 = vpop.permute.xlu0 %978
        %980 = vst [vmem:[%s214] sm:$0xff] %v979
        %s981 = sand.u32 %s125, 1
        %s982 = scalar_lea.sflag [#allocation3], %s981
        %s983 = sand.u32 %s125, 1
        %s984 = smul.addr %s983, 8
        %s985 = scalar_lea.vmem [#allocation2], %s984
        // Predicated region
        $region44: #{tpu_custom_call.1} parent=35 // pred_check
          %p986 = pneg %p135
        $region45: #{tpu_custom_call.1} parent=35 // pred_check_branch
          %988 = sbr.rel (%p986) target = $region47
        $region46: #{tpu_custom_call.1} parent=35 // pred_region
          %s990 = ssub.s32 128, 128
          %991 = vsyncadd %s982, %s990
          %s992 = smul.addr %s18, 128
          %s993 = scalar_lea.hbm %s4, %s992
          %s995 = sshll.u32 %s985, 4
          %s996 = int_to_ptr.vmem [resolvable:$true] %s995
          %998 = dma.vmem_to_hbm [thread:$0]  %s996, 128, %s993, %s982
        $region47: #{tpu_custom_call.1} parent=35 // pred_fallthru
          _
      $region36: #{tpu_custom_call.1} parent=5 // pred_fallthru
        _
      %p999 = scmp.le.s32.totalorder 2, %s13
      // Predicated region
      $region48: #{tpu_custom_call.1} parent=5 // pred_check
        %p1000 = pneg %p999
      $region49: #{tpu_custom_call.1} parent=5 // pred_check_branch
        %1002 = sbr.rel (%p1000) target = $region51
      $region50: #{tpu_custom_call.1} parent=5 // pred_region
        %s1003 = ssub.s32 %s13, 2
        // Predicated region
        $region52: #{tpu_custom_call.1} parent=50 // pred_check
          %p1004 = pneg %p141
        $region53: #{tpu_custom_call.1} parent=50 // pred_check_branch
          %1006 = sbr.rel (%p1004) target = $region55
        $region54: #{tpu_custom_call.1} parent=50 // pred_region
          %s1007 = sand.u32 %s126, 1
          %s1008 = scalar_lea.sflag [#allocation3], %s1007
          %s1009 = sand.u32 %s126, 1
          %s1010 = smul.addr %s1009, 8
          %s1011 = scalar_lea.vmem [#allocation2], %s1010
          %1012 = dma.done %s1008, 128
        $region55: #{tpu_custom_call.1} parent=50 // pred_fallthru
          _
      $region51: #{tpu_custom_call.1} parent=5 // pred_fallthru
        _
    $region6: #{tpu_custom_call.1} parent=1 // loop_footer
      %s17 = sadd.s32 1, %s13
    $region7: #{tpu_custom_call.1} parent=1 // loop_footer_branch
      %12 = sbr.rel target = $region3
    $region8: #{tpu_custom_call.1} parent=1 // loop_exit
      _
    %1013 = vsyncpa [#allocation3], 1
    %s1014 = scalar_lea.sflag [#allocation3], 1
    %1015 = vsyncpa %s1014, 1

</llo_original>
